<compile_context>
chip_gen: v7x
topology: tpu7x:2x2x1
jax: 0.10.0
libtpu: 0.0.40
codegen_flags: <defaults>
</compile_context>

<pallas_src>
import jax
import jax.numpy as jnp
from jax import lax
from jax.experimental import pallas as pl
from jax.experimental.pallas import tpu as pltpu

# ----------------------- small synthetic config -----------------------
B, U, T = 2, 4, 8          # batch, utterances per dialogue, tokens per utterance
V, E = 50, 32              # vocab size, embedding dim
H = 16                     # cfg['enc_hid_size']
D = 2 * H                  # encoder feature dim (== E == 2H == 32 -> every weight slab is 32 lanes)
C = 5                      # cfg['num_labels']
PAD = 0                    # cfg['pad']
BN_EPS = 1e-5
LEAKY_SLOPE = 0.01

N = B * U * T              # 64 token rows
BU = B * U                 # 8 utterance rows

# wslab row offsets (all 8-aligned)
_W_WORD, _W_POS_S, _W_POS_T, _W_UTTR = 0, 32, 64, 96
_W1A, _W1B, _W1C, _W2, _VEC = 128, 160, 192, 224, 256
W_ROWS = 264
# islab row offsets (all 8-aligned sections)
_I_IDX, _I_TLEN, _I_DLEN, I_ROWS = 0, 8, 16, 24


def _full_spec(shape):
    nd = len(shape)
    return pl.BlockSpec(shape, lambda *_, nd=nd: (0,) * nd)


# ----------------------- fused encoder + classifier + loss kernel -----------------------
def _fused_kernel(w_ref, a_ref, i_ref, tgt_ref, logits_ref, loss_ref):
    f32 = jnp.float32

    # ---- unpack slabs (static, tile-aligned slices) ----
    tok = a_ref[0:N, :]                              # [64,32] token embeddings
    pos_s = a_ref[N:N + BU, :]                       # [8,32]  src utterance-position embeddings
    pos_t = a_ref[N + BU:N + 2 * BU, :]              # [8,32]  tar utterance-position embeddings

    vecs = w_ref[_VEC:_VEC + 8, :]                   # [8,32]  packed vectors
    u_w, u_d = vecs[0:1, :], vecs[1:2, :]
    b1, bn_g, bn_b, b2 = vecs[2:3, :], vecs[3:4, :], vecs[4:5, :], vecs[5:6, :]

    gidx = i_ref[_I_IDX:_I_IDX + 2 * B, :]           # [4,1] flat src/tar token indices
    tlen = i_ref[_I_TLEN:_I_TLEN + BU, :]            # [8,1] tokens per utterance
    dlen = i_ref[_I_DLEN:_I_DLEN + B, :]             # [2,1] utterances per dialogue

    # ---- word-level token encoding (MXU, f32) ----
    h = jnp.tanh(jnp.dot(tok, w_ref[_W_WORD:_W_WORD + E, :],
                         preferred_element_type=f32))                    # [64,32]

    # word-level attention scores: VPU mul + lane reduce
    scores = jnp.sum(h * u_w, axis=-1, keepdims=True)                    # [64,1]
    scores = scores - jnp.max(scores)    # global max-subtract: cancels within each softmax group
    e = jnp.exp(scores)                                                  # [64,1]

    # masked segment matrix: seg[r,c] = (c >= r*T) & (c < r*T + tlen[r])   (token mask folded in)
    r_w = lax.broadcasted_iota(jnp.int32, (BU, N), 0)
    c_w = lax.broadcasted_iota(jnp.int32, (BU, N), 1)
    lo_w = r_w * T
    seg = jnp.logical_and(c_w >= lo_w, c_w < lo_w + tlen).astype(f32)    # [8,64]

    # attention-weighted utterance vectors via MXU (masked softmax == num/den)
    num = jnp.dot(seg, e * h, preferred_element_type=f32)                # [8,32]
    den = jnp.dot(seg, e, preferred_element_type=f32)                    # [8,1]
    uttr = num / den   # exact division (parity); lens >= 1 in this setup so den > 0

    # dual utterance-position projection (two accumulating MXU dots; no lane concat)
    uttr = (uttr
            + jnp.dot(pos_s, w_ref[_W_POS_S:_W_POS_S + E, :], preferred_element_type=f32)
            + jnp.dot(pos_t, w_ref[_W_POS_T:_W_POS_T + E, :], preferred_element_type=f32))

    # ---- dialogue-level masked attention over utterances ----
    hu = jnp.tanh(jnp.dot(uttr, w_ref[_W_UTTR:_W_UTTR + D, :], preferred_element_type=f32))
    ds = jnp.sum(hu * u_d, axis=-1, keepdims=True)                       # [8,1]
    ds = ds - jnp.max(ds)
    q = jnp.exp(ds)

    r_d = lax.broadcasted_iota(jnp.int32, (B, BU), 0)
    c_d = lax.broadcasted_iota(jnp.int32, (B, BU), 1)
    lo_d = r_d * U
    segd = jnp.logical_and(c_d >= lo_d, c_d < lo_d + dlen).astype(f32)   # [2,8]

    cnum = jnp.dot(segd, q * uttr, preferred_element_type=f32)           # [2,32]
    cden = jnp.dot(segd, q, preferred_element_type=f32)                  # [2,1]
    cls = cnum / cden                                                    # [2,32]

    # ---- src/tar token-feature gather: one-hot (iota == idx) + single MXU matmul ----
    c_g = lax.broadcasted_iota(jnp.int32, (2 * B, N), 1)
    onehot = (c_g == gidx).astype(f32)                                   # [4,64]
    gathered = jnp.dot(onehot, h, preferred_element_type=f32)            # [4,32]
    src_feat = gathered[0:B, :]                                          # [2,32]
    tar_feat = gathered[B:2 * B, :]                                      # [2,32]

    # ---- classifier: split-w1 accumulating dots -> BatchNorm1d (batch stats) -> LeakyReLU -> Linear
    h1 = (jnp.dot(cls, w_ref[_W1A:_W1A + D, :], preferred_element_type=f32)
          + jnp.dot(src_feat, w_ref[_W1B:_W1B + D, :], preferred_element_type=f32)
          + jnp.dot(tar_feat, w_ref[_W1C:_W1C + D, :], preferred_element_type=f32)
          + b1)                                                          # [2,32]

    mean = jnp.mean(h1, axis=0, keepdims=True)
    var = jnp.mean((h1 - mean) ** 2, axis=0, keepdims=True)              # biased (training mode)
    hn = (h1 - mean) * lax.rsqrt(var + BN_EPS) * bn_g + bn_b
    act = jnp.where(hn >= 0.0, hn, LEAKY_SLOPE * hn)                     # LeakyReLU

    logits = (jnp.dot(act, w_ref[_W2:_W2 + D, :], preferred_element_type=f32) + b2)[:, 0:C]
    logits_ref[...] = logits                                             # [2,5]

    # binary_cross_entropy_with_logits, reduction='mean'
    y = tgt_ref[...]
    loss_el = jnp.maximum(logits, 0.0) - logits * y + jnp.log1p(jnp.exp(-jnp.abs(logits)))
    loss_ref[...] = jnp.broadcast_to(jnp.mean(loss_el), (1, 1))


def fused_forward_pallas(wslab, aslab, islab, targets):
    flops = (2 * N * E * D                 # word-level projection
             + 2 * BU * N * (D + 1)        # seg @ (e*h), seg @ e
             + 2 * 2 * BU * E * D          # dual position projections
             + 2 * BU * D * D              # utterance projection
             + 2 * B * BU * (D + 1)        # dialogue-level weighted sums
             + 2 * (2 * B) * N * D         # one-hot gather matmul
             + 4 * 2 * B * D * D           # classifier matmuls
             + 16 * N * D)                 # masks / softmax / BN / elementwise
    transcendentals = N * D + BU * D + N + BU + B * D + 2 * B * C
    bytes_accessed = 4 * (int(wslab.size) + int(aslab.size) + int(islab.size)
                          + int(targets.size) + B * C + 1)

    return pl.pallas_call(
        _fused_kernel,
        out_shape=(jax.ShapeDtypeStruct((B, C), jnp.float32),
                   jax.ShapeDtypeStruct((1, 1), jnp.float32)),
        grid=(1,),
        in_specs=[_full_spec((W_ROWS, D)), _full_spec((N + 2 * BU, E)),
                  _full_spec((I_ROWS, 1)), _full_spec((B, C))],
        out_specs=(_full_spec((B, C)), _full_spec((1, 1))),
        # Single grid step; if B is ever scaled up, block the grid over B (or B*U), mark it
        # "parallel" (v7x: 2 TensorCores), and size tiles for v7x's 64 MiB VMEM, 256-aligned
        # lane-dense matmul blocks on v6e/v7x (128 on v5e).
        compiler_params=pltpu.CompilerParams(dimension_semantics=("arbitrary",)),
        cost_estimate=pl.CostEstimate(flops=flops, transcendentals=transcendentals,
                                      bytes_accessed=bytes_accessed),
    )(wslab, aslab, islab, targets)


# ----------------------- forward (glue: embedding gathers + slab packing) -----------------------
def relation_extractor_forward(params, tokens, token_tags, token_lens, dlg_lens,
                               src_pos_tokens, tar_pos_tokens, src_uttr_idx,
                               src_uttr_pos, tar_uttr_idx, tar_uttr_pos, targets):
    del token_tags  # cfg.get('use_ent_tags', False) -> token-tag embeddings not added
    emb = params['embedding']
    token_features = jnp.take(emb, tokens, axis=0)                       # [B,U,T,E]
    src_pos_features = jnp.take(emb, src_pos_tokens, axis=0)             # [B,U,E]
    tar_pos_features = jnp.take(emb, tar_pos_tokens, axis=0)             # [B,U,E]

    # single lane-dense f32 activation slab: [token rows | src pos rows | tar pos rows]
    aslab = jnp.concatenate([token_features.reshape(N, E),
                             src_pos_features.reshape(BU, E),
                             tar_pos_features.reshape(BU, E)], axis=0)   # [80,32]

    # int32 slab: [gather idx (padded to 8) | token lens (8) | dlg lens (padded to 8)]
    base = jnp.arange(B, dtype=jnp.int32) * (U * T)
    src_flat = base + src_uttr_idx.astype(jnp.int32) * T + src_uttr_pos.astype(jnp.int32)
    tar_flat = base + tar_uttr_idx.astype(jnp.int32) * T + tar_uttr_pos.astype(jnp.int32)
    gidx = jnp.concatenate([src_flat, tar_flat], axis=0)                 # [2B]
    islab = jnp.concatenate([
        jnp.pad(gidx, (0, 8 - 2 * B)),
        token_lens.reshape(BU).astype(jnp.int32),
        jnp.pad(dlg_lens.astype(jnp.int32), (0, 8 - B)),
    ], axis=0).reshape(I_ROWS, 1)                                        # [24,1]

    logits, loss = fused_forward_pallas(params['wslab'], aslab, islab, targets)
    return logits, loss[0, 0]


# ----------------------- deterministic parameter init (+ one-time weight-slab packing) ----------
def make_params(key):
    ks = jax.random.split(key, 8)
    emb = 0.1 * jax.random.normal(ks[0], (V, E), jnp.float32)
    emb = emb.at[PAD].set(0.0)                       # nn.Embedding(padding_idx=pad)

    w_word = 0.1 * jax.random.normal(ks[1], (E, D), jnp.float32)
    u_w = 0.1 * jax.random.normal(ks[2], (1, D), jnp.float32)
    w_pos = 0.1 * jax.random.normal(ks[3], (2 * E, D), jnp.float32)
    w_uttr = 0.1 * jax.random.normal(ks[4], (D, D), jnp.float32)
    u_d = 0.1 * jax.random.normal(ks[5], (1, D), jnp.float32)
    # classifier: Linear(6H -> 2H), BatchNorm1d(2H), LeakyReLU, Linear(2H -> C)
    w1 = 0.1 * jax.random.normal(ks[6], (6 * H, 2 * H), jnp.float32)
    b1 = jnp.zeros((1, 2 * H), jnp.float32)
    bn_gamma = jnp.ones((1, 2 * H), jnp.float32)
    bn_beta = jnp.zeros((1, 2 * H), jnp.float32)
    w2 = 0.1 * jax.random.normal(ks[7], (2 * H, C), jnp.float32)
    b2 = jnp.zeros((1, C), jnp.float32)

    # pack EVERY parameter into one static [264,32] slab (built once, reused every step:
    # one DMA descriptor, no per-step casts/copies in front of the custom call)
    w2_pad = jnp.zeros((2 * H, D), jnp.float32).at[:, :C].set(w2)
    b2_pad = jnp.zeros((1, D), jnp.float32).at[:, :C].set(b2)
    vec_block = jnp.concatenate(
        [u_w, u_d, b1, bn_gamma, bn_beta, b2_pad, jnp.zeros((2, D), jnp.float32)], axis=0)
    wslab = jnp.concatenate([w_word, w_pos, w_uttr, w1, w2_pad, vec_block], axis=0)
    assert wslab.shape == (W_ROWS, D)

    return {'embedding': emb, 'wslab': wslab}


if __name__ == "__main__":
    key = jax.random.PRNGKey(0)
    kp, k1, k2, k3, k4, k5, k6, k7 = jax.random.split(key, 8)

    params = make_params(kp)

    tokens = jax.random.randint(k1, (B, U, T), 1, V, dtype=jnp.int32)
    token_tags = jax.random.randint(k2, (B, U, T), 1, V, dtype=jnp.int32)
    token_lens = jax.random.randint(k3, (B, U), 1, T + 1, dtype=jnp.int32)
    dlg_lens = jax.random.randint(k4, (B,), 1, U + 1, dtype=jnp.int32)
    src_pos_tokens = jax.random.randint(k5, (B, U), 1, V, dtype=jnp.int32)
    tar_pos_tokens = jax.random.randint(k6, (B, U), 1, V, dtype=jnp.int32)
    src_uttr_idx = jnp.zeros((B,), jnp.int32)
    src_uttr_pos = jnp.zeros((B,), jnp.int32)
    tar_uttr_idx = jnp.minimum(dlg_lens - 1, U - 1).astype(jnp.int32)
    tar_uttr_pos = jnp.minimum(token_lens[jnp.arange(B), tar_uttr_idx] - 1, T - 1).astype(jnp.int32)
    targets = jax.random.bernoulli(k7, 0.5, (B, C)).astype(jnp.float32)

    fwd = jax.jit(relation_extractor_forward)
    logits, loss = fwd(params, tokens, token_tags, token_lens, dlg_lens,
                       src_pos_tokens, tar_pos_tokens, src_uttr_idx, src_uttr_pos,
                       tar_uttr_idx, tar_uttr_pos, targets)
    jax.block_until_ready((logits, loss))

    assert logits.shape == (B, C) and loss.shape == ()
    assert bool(jnp.all(jnp.isfinite(logits))) and bool(jnp.isfinite(loss))
    print("KERNEL_OK")
</pallas_src>

<mosaic_0001>
module attributes {stable_mosaic.version = 11 : i64} {
  func.func @_fused_kernel(%arg0: i32, %arg1: memref<264x32xf32, #tpu.memory_space<vmem>>, %arg2: memref<80x32xf32, #tpu.memory_space<vmem>>, %arg3: memref<24x1xi32, #tpu.memory_space<vmem>>, %arg4: memref<2x5xf32, #tpu.memory_space<vmem>>, %arg5: memref<2x5xf32, #tpu.memory_space<vmem>>, %arg6: memref<1x1xf32, #tpu.memory_space<vmem>>) attributes {dimension_semantics = [#tpu.dimension_semantics<arbitrary>], iteration_bounds = array<i64: 1>, scalar_prefetch = 0 : i64, scratch_operands = 0 : i64, tpu.core_type = #tpu.core_type<tc>, window_params = [{pipeline_mode = #tpu.pipeline_mode<synchronous>, transform_indices = @transform_0, window_bounds = array<i64: 264, 32>}, {pipeline_mode = #tpu.pipeline_mode<synchronous>, transform_indices = @transform_1, window_bounds = array<i64: 80, 32>}, {pipeline_mode = #tpu.pipeline_mode<synchronous>, transform_indices = @transform_2, window_bounds = array<i64: 24, 1>}, {pipeline_mode = #tpu.pipeline_mode<synchronous>, transform_indices = @transform_3, window_bounds = array<i64: 2, 5>}, {pipeline_mode = #tpu.pipeline_mode<synchronous>, transform_indices = @transform_4, window_bounds = array<i64: 2, 5>}, {pipeline_mode = #tpu.pipeline_mode<synchronous>, transform_indices = @transform_5, window_bounds = array<i64: 1, 1>}]} {
    %c0 = arith.constant 0 : index
    %c0_0 = arith.constant 0 : index
    %0 = vector.load %arg2[%c0, %c0_0] : memref<80x32xf32, #tpu.memory_space<vmem>>, vector<64x32xf32>
    %c64 = arith.constant 64 : index
    %c0_1 = arith.constant 0 : index
    %1 = vector.load %arg2[%c64, %c0_1] : memref<80x32xf32, #tpu.memory_space<vmem>>, vector<8x32xf32>
    %c72 = arith.constant 72 : index
    %c0_2 = arith.constant 0 : index
    %2 = vector.load %arg2[%c72, %c0_2] : memref<80x32xf32, #tpu.memory_space<vmem>>, vector<8x32xf32>
    %c256 = arith.constant 256 : index
    %c0_3 = arith.constant 0 : index
    %3 = vector.load %arg1[%c256, %c0_3] : memref<264x32xf32, #tpu.memory_space<vmem>>, vector<8x32xf32>
    %4 = vector.extract_strided_slice %3 {offsets = [0, 0], sizes = [1, 32], strides = [1, 1]} : vector<8x32xf32> to vector<1x32xf32>
    %5 = vector.extract_strided_slice %3 {offsets = [1, 0], sizes = [1, 32], strides = [1, 1]} : vector<8x32xf32> to vector<1x32xf32>
    %6 = vector.extract_strided_slice %3 {offsets = [2, 0], sizes = [1, 32], strides = [1, 1]} : vector<8x32xf32> to vector<1x32xf32>
    %7 = vector.extract_strided_slice %3 {offsets = [3, 0], sizes = [1, 32], strides = [1, 1]} : vector<8x32xf32> to vector<1x32xf32>
    %8 = vector.extract_strided_slice %3 {offsets = [4, 0], sizes = [1, 32], strides = [1, 1]} : vector<8x32xf32> to vector<1x32xf32>
    %9 = vector.extract_strided_slice %3 {offsets = [5, 0], sizes = [1, 32], strides = [1, 1]} : vector<8x32xf32> to vector<1x32xf32>
    %c0_4 = arith.constant 0 : index
    %c0_5 = arith.constant 0 : index
    %10 = vector.load %arg3[%c0_4, %c0_5] : memref<24x1xi32, #tpu.memory_space<vmem>>, vector<4x1xi32>
    %c8 = arith.constant 8 : index
    %c0_6 = arith.constant 0 : index
    %11 = vector.load %arg3[%c8, %c0_6] : memref<24x1xi32, #tpu.memory_space<vmem>>, vector<8x1xi32>
    %c16 = arith.constant 16 : index
    %c0_7 = arith.constant 0 : index
    %12 = vector.load %arg3[%c16, %c0_7] : memref<24x1xi32, #tpu.memory_space<vmem>>, vector<2x1xi32>
    %c0_8 = arith.constant 0 : index
    %c0_9 = arith.constant 0 : index
    %13 = vector.load %arg1[%c0_8, %c0_9] : memref<264x32xf32, #tpu.memory_space<vmem>>, vector<32x32xf32>
    %cst = arith.constant dense<0.000000e+00> : vector<64x32xf32>
    %14 = tpu.matmul %0, %13, %cst {dimension_numbers = #tpu.dot_dimension_numbers<[1], [0], [0], [1], [0, 0, 1, 1], [], []>} : vector<64x32xf32>, vector<32x32xf32>, vector<64x32xf32> -> vector<64x32xf32>
    %15 = math.tanh %14 : vector<64x32xf32>
    %16 = vector.broadcast %4 : vector<1x32xf32> to vector<64x32xf32>
    %17 = arith.mulf %15, %16 : vector<64x32xf32>
    %cst_10 = arith.constant dense<0.000000e+00> : vector<64xf32>
    %18 = vector.multi_reduction <add>, %17, %cst_10 [1] : vector<64x32xf32> to vector<64xf32>
    %19 = vector.shape_cast %18 : vector<64xf32> to vector<64x1xf32>
    %20 = vector.shape_cast %19 : vector<64x1xf32> to vector<1x64x1xf32>
    %cst_11 = arith.constant dense<0xFF800000> : vector<1xf32>
    %21 = vector.multi_reduction <maximumf>, %20, %cst_11 [1, 2] : vector<1x64x1xf32> to vector<1xf32>
    %22 = vector.shape_cast %21 : vector<1xf32> to vector<1x1x1xf32>
    %23 = vector.extract %22[0, 0, 0] : f32 from vector<1x1x1xf32>
    %24 = vector.broadcast %23 : f32 to vector<64x1xf32>
    %25 = arith.subf %19, %24 : vector<64x1xf32>
    %26 = math.exp %25 : vector<64x1xf32>
    %27 = tpu.iota {dimensions = array<i32: 0>} : vector<8x64xi32>
    %28 = tpu.iota {dimensions = array<i32: 1>} : vector<8x64xi32>
    %c8_i32 = arith.constant 8 : i32
    %29 = vector.broadcast %c8_i32 : i32 to vector<8x64xi32>
    %30 = arith.muli %27, %29 : vector<8x64xi32>
    %31 = arith.cmpi sge, %28, %30 : vector<8x64xi32>
    %32 = vector.broadcast %11 : vector<8x1xi32> to vector<8x64xi32>
    %33 = arith.addi %30, %32 : vector<8x64xi32>
    %34 = arith.cmpi slt, %28, %33 : vector<8x64xi32>
    %35 = arith.andi %31, %34 : vector<8x64xi1>
    %36 = arith.extui %35 : vector<8x64xi1> to vector<8x64xi32>
    %37 = arith.sitofp %36 : vector<8x64xi32> to vector<8x64xf32>
    %38 = vector.broadcast %26 : vector<64x1xf32> to vector<64x32xf32>
    %39 = arith.mulf %38, %15 : vector<64x32xf32>
    %cst_12 = arith.constant dense<0.000000e+00> : vector<8x32xf32>
    %40 = tpu.matmul %37, %39, %cst_12 {dimension_numbers = #tpu.dot_dimension_numbers<[1], [0], [0], [1], [0, 0, 1, 1], [], []>} : vector<8x64xf32>, vector<64x32xf32>, vector<8x32xf32> -> vector<8x32xf32>
    %cst_13 = arith.constant dense<0.000000e+00> : vector<8x1xf32>
    %41 = tpu.matmul %37, %26, %cst_13 {dimension_numbers = #tpu.dot_dimension_numbers<[1], [0], [0], [1], [0, 0, 1, 1], [], []>} : vector<8x64xf32>, vector<64x1xf32>, vector<8x1xf32> -> vector<8x1xf32>
    %42 = vector.broadcast %41 : vector<8x1xf32> to vector<8x32xf32>
    %43 = arith.divf %40, %42 : vector<8x32xf32>
    %c32 = arith.constant 32 : index
    %c0_14 = arith.constant 0 : index
    %44 = vector.load %arg1[%c32, %c0_14] : memref<264x32xf32, #tpu.memory_space<vmem>>, vector<32x32xf32>
    %cst_15 = arith.constant dense<0.000000e+00> : vector<8x32xf32>
    %45 = tpu.matmul %1, %44, %cst_15 {dimension_numbers = #tpu.dot_dimension_numbers<[1], [0], [0], [1], [0, 0, 1, 1], [], []>} : vector<8x32xf32>, vector<32x32xf32>, vector<8x32xf32> -> vector<8x32xf32>
    %46 = arith.addf %43, %45 : vector<8x32xf32>
    %c64_16 = arith.constant 64 : index
    %c0_17 = arith.constant 0 : index
    %47 = vector.load %arg1[%c64_16, %c0_17] : memref<264x32xf32, #tpu.memory_space<vmem>>, vector<32x32xf32>
    %cst_18 = arith.constant dense<0.000000e+00> : vector<8x32xf32>
    %48 = tpu.matmul %2, %47, %cst_18 {dimension_numbers = #tpu.dot_dimension_numbers<[1], [0], [0], [1], [0, 0, 1, 1], [], []>} : vector<8x32xf32>, vector<32x32xf32>, vector<8x32xf32> -> vector<8x32xf32>
    %49 = arith.addf %46, %48 : vector<8x32xf32>
    %c96 = arith.constant 96 : index
    %c0_19 = arith.constant 0 : index
    %50 = vector.load %arg1[%c96, %c0_19] : memref<264x32xf32, #tpu.memory_space<vmem>>, vector<32x32xf32>
    %cst_20 = arith.constant dense<0.000000e+00> : vector<8x32xf32>
    %51 = tpu.matmul %49, %50, %cst_20 {dimension_numbers = #tpu.dot_dimension_numbers<[1], [0], [0], [1], [0, 0, 1, 1], [], []>} : vector<8x32xf32>, vector<32x32xf32>, vector<8x32xf32> -> vector<8x32xf32>
    %52 = math.tanh %51 : vector<8x32xf32>
    %53 = vector.broadcast %5 : vector<1x32xf32> to vector<8x32xf32>
    %54 = arith.mulf %52, %53 : vector<8x32xf32>
    %cst_21 = arith.constant dense<0.000000e+00> : vector<8xf32>
    %55 = vector.multi_reduction <add>, %54, %cst_21 [1] : vector<8x32xf32> to vector<8xf32>
    %56 = vector.shape_cast %55 : vector<8xf32> to vector<8x1xf32>
    %57 = vector.shape_cast %56 : vector<8x1xf32> to vector<1x8x1xf32>
    %cst_22 = arith.constant dense<0xFF800000> : vector<1xf32>
    %58 = vector.multi_reduction <maximumf>, %57, %cst_22 [1, 2] : vector<1x8x1xf32> to vector<1xf32>
    %59 = vector.shape_cast %58 : vector<1xf32> to vector<1x1x1xf32>
    %60 = vector.extract %59[0, 0, 0] : f32 from vector<1x1x1xf32>
    %61 = vector.broadcast %60 : f32 to vector<8x1xf32>
    %62 = arith.subf %56, %61 : vector<8x1xf32>
    %63 = math.exp %62 : vector<8x1xf32>
    %64 = tpu.iota {dimensions = array<i32: 0>} : vector<2x8xi32>
    %65 = tpu.iota {dimensions = array<i32: 1>} : vector<2x8xi32>
    %c4_i32 = arith.constant 4 : i32
    %66 = vector.broadcast %c4_i32 : i32 to vector<2x8xi32>
    %67 = arith.muli %64, %66 : vector<2x8xi32>
    %68 = arith.cmpi sge, %65, %67 : vector<2x8xi32>
    %69 = vector.broadcast %12 : vector<2x1xi32> to vector<2x8xi32>
    %70 = arith.addi %67, %69 : vector<2x8xi32>
    %71 = arith.cmpi slt, %65, %70 : vector<2x8xi32>
    %72 = arith.andi %68, %71 : vector<2x8xi1>
    %73 = arith.extui %72 : vector<2x8xi1> to vector<2x8xi32>
    %74 = arith.sitofp %73 : vector<2x8xi32> to vector<2x8xf32>
    %75 = vector.broadcast %63 : vector<8x1xf32> to vector<8x32xf32>
    %76 = arith.mulf %75, %49 : vector<8x32xf32>
    %cst_23 = arith.constant dense<0.000000e+00> : vector<2x32xf32>
    %77 = tpu.matmul %74, %76, %cst_23 {dimension_numbers = #tpu.dot_dimension_numbers<[1], [0], [0], [1], [0, 0, 1, 1], [], []>} : vector<2x8xf32>, vector<8x32xf32>, vector<2x32xf32> -> vector<2x32xf32>
    %cst_24 = arith.constant dense<0.000000e+00> : vector<2x1xf32>
    %78 = tpu.matmul %74, %63, %cst_24 {dimension_numbers = #tpu.dot_dimension_numbers<[1], [0], [0], [1], [0, 0, 1, 1], [], []>} : vector<2x8xf32>, vector<8x1xf32>, vector<2x1xf32> -> vector<2x1xf32>
    %79 = vector.broadcast %78 : vector<2x1xf32> to vector<2x32xf32>
    %80 = arith.divf %77, %79 : vector<2x32xf32>
    %81 = tpu.iota {dimensions = array<i32: 1>} : vector<4x64xi32>
    %82 = vector.broadcast %10 : vector<4x1xi32> to vector<4x64xi32>
    %83 = arith.cmpi eq, %81, %82 : vector<4x64xi32>
    %84 = arith.extui %83 : vector<4x64xi1> to vector<4x64xi32>
    %85 = arith.sitofp %84 : vector<4x64xi32> to vector<4x64xf32>
    %cst_25 = arith.constant dense<0.000000e+00> : vector<4x32xf32>
    %86 = tpu.matmul %85, %15, %cst_25 {dimension_numbers = #tpu.dot_dimension_numbers<[1], [0], [0], [1], [0, 0, 1, 1], [], []>} : vector<4x64xf32>, vector<64x32xf32>, vector<4x32xf32> -> vector<4x32xf32>
    %87 = vector.extract_strided_slice %86 {offsets = [0, 0], sizes = [2, 32], strides = [1, 1]} : vector<4x32xf32> to vector<2x32xf32>
    %88 = vector.extract_strided_slice %86 {offsets = [2, 0], sizes = [2, 32], strides = [1, 1]} : vector<4x32xf32> to vector<2x32xf32>
    %c128 = arith.constant 128 : index
    %c0_26 = arith.constant 0 : index
    %89 = vector.load %arg1[%c128, %c0_26] : memref<264x32xf32, #tpu.memory_space<vmem>>, vector<32x32xf32>
    %cst_27 = arith.constant dense<0.000000e+00> : vector<2x32xf32>
    %90 = tpu.matmul %80, %89, %cst_27 {dimension_numbers = #tpu.dot_dimension_numbers<[1], [0], [0], [1], [0, 0, 1, 1], [], []>} : vector<2x32xf32>, vector<32x32xf32>, vector<2x32xf32> -> vector<2x32xf32>
    %c160 = arith.constant 160 : index
    %c0_28 = arith.constant 0 : index
    %91 = vector.load %arg1[%c160, %c0_28] : memref<264x32xf32, #tpu.memory_space<vmem>>, vector<32x32xf32>
    %cst_29 = arith.constant dense<0.000000e+00> : vector<2x32xf32>
    %92 = tpu.matmul %87, %91, %cst_29 {dimension_numbers = #tpu.dot_dimension_numbers<[1], [0], [0], [1], [0, 0, 1, 1], [], []>} : vector<2x32xf32>, vector<32x32xf32>, vector<2x32xf32> -> vector<2x32xf32>
    %93 = arith.addf %90, %92 : vector<2x32xf32>
    %c192 = arith.constant 192 : index
    %c0_30 = arith.constant 0 : index
    %94 = vector.load %arg1[%c192, %c0_30] : memref<264x32xf32, #tpu.memory_space<vmem>>, vector<32x32xf32>
    %cst_31 = arith.constant dense<0.000000e+00> : vector<2x32xf32>
    %95 = tpu.matmul %88, %94, %cst_31 {dimension_numbers = #tpu.dot_dimension_numbers<[1], [0], [0], [1], [0, 0, 1, 1], [], []>} : vector<2x32xf32>, vector<32x32xf32>, vector<2x32xf32> -> vector<2x32xf32>
    %96 = arith.addf %93, %95 : vector<2x32xf32>
    %97 = vector.broadcast %6 : vector<1x32xf32> to vector<2x32xf32>
    %98 = arith.addf %96, %97 : vector<2x32xf32>
    %cst_32 = arith.constant dense<0.000000e+00> : vector<32xf32>
    %99 = vector.multi_reduction <add>, %98, %cst_32 [0] : vector<2x32xf32> to vector<32xf32>
    %100 = vector.shape_cast %99 : vector<32xf32> to vector<1x32xf32>
    %cst_33 = arith.constant 2.000000e+00 : f32
    %101 = vector.broadcast %cst_33 : f32 to vector<1x32xf32>
    %102 = arith.divf %100, %101 : vector<1x32xf32>
    %103 = vector.broadcast %102 : vector<1x32xf32> to vector<2x32xf32>
    %104 = arith.subf %98, %103 : vector<2x32xf32>
    %105 = arith.mulf %104, %104 : vector<2x32xf32>
    %cst_34 = arith.constant dense<0.000000e+00> : vector<32xf32>
    %106 = vector.multi_reduction <add>, %105, %cst_34 [0] : vector<2x32xf32> to vector<32xf32>
    %107 = vector.shape_cast %106 : vector<32xf32> to vector<1x32xf32>
    %cst_35 = arith.constant 2.000000e+00 : f32
    %108 = vector.broadcast %cst_35 : f32 to vector<1x32xf32>
    %109 = arith.divf %107, %108 : vector<1x32xf32>
    %110 = vector.broadcast %102 : vector<1x32xf32> to vector<2x32xf32>
    %111 = arith.subf %98, %110 : vector<2x32xf32>
    %cst_36 = arith.constant 9.99999974E-6 : f32
    %112 = vector.broadcast %cst_36 : f32 to vector<1x32xf32>
    %113 = arith.addf %109, %112 : vector<1x32xf32>
    %114 = math.rsqrt %113 : vector<1x32xf32>
    %115 = vector.broadcast %114 : vector<1x32xf32> to vector<2x32xf32>
    %116 = arith.mulf %111, %115 : vector<2x32xf32>
    %117 = vector.broadcast %7 : vector<1x32xf32> to vector<2x32xf32>
    %118 = arith.mulf %116, %117 : vector<2x32xf32>
    %119 = vector.broadcast %8 : vector<1x32xf32> to vector<2x32xf32>
    %120 = arith.addf %118, %119 : vector<2x32xf32>
    %cst_37 = arith.constant 0.000000e+00 : f32
    %121 = vector.broadcast %cst_37 : f32 to vector<2x32xf32>
    %122 = arith.cmpf oge, %120, %121 : vector<2x32xf32>
    %cst_38 = arith.constant 0.00999999977 : f32
    %123 = vector.broadcast %cst_38 : f32 to vector<2x32xf32>
    %124 = arith.mulf %123, %120 : vector<2x32xf32>
    %125 = arith.select %122, %120, %124 : vector<2x32xi1>, vector<2x32xf32>
    %c224 = arith.constant 224 : index
    %c0_39 = arith.constant 0 : index
    %126 = vector.load %arg1[%c224, %c0_39] : memref<264x32xf32, #tpu.memory_space<vmem>>, vector<32x32xf32>
    %cst_40 = arith.constant dense<0.000000e+00> : vector<2x32xf32>
    %127 = tpu.matmul %125, %126, %cst_40 {dimension_numbers = #tpu.dot_dimension_numbers<[1], [0], [0], [1], [0, 0, 1, 1], [], []>} : vector<2x32xf32>, vector<32x32xf32>, vector<2x32xf32> -> vector<2x32xf32>
    %128 = vector.broadcast %9 : vector<1x32xf32> to vector<2x32xf32>
    %129 = arith.addf %127, %128 : vector<2x32xf32>
    %130 = vector.extract_strided_slice %129 {offsets = [0, 0], sizes = [2, 5], strides = [1, 1]} : vector<2x32xf32> to vector<2x5xf32>
    %c0_41 = arith.constant 0 : index
    %c0_42 = arith.constant 0 : index
    %131 = vector.load %arg5[%c0_41, %c0_42] : memref<2x5xf32, #tpu.memory_space<vmem>>, vector<2x5xf32>
    tpu.vector_store %arg5[%c0_41, %c0_42], %130 {strides = array<i32>} : memref<2x5xf32, #tpu.memory_space<vmem>>, vector<2x5xf32>,
    %c0_43 = arith.constant 0 : index
    %c0_44 = arith.constant 0 : index
    %132 = vector.load %arg4[%c0_43, %c0_44] : memref<2x5xf32, #tpu.memory_space<vmem>>, vector<2x5xf32>
    %cst_45 = arith.constant 0.000000e+00 : f32
    %133 = vector.broadcast %cst_45 : f32 to vector<2x5xf32>
    %134 = arith.maximumf %130, %133 : vector<2x5xf32>
    %135 = arith.mulf %130, %132 : vector<2x5xf32>
    %136 = arith.subf %134, %135 : vector<2x5xf32>
    %137 = math.absf %130 : vector<2x5xf32>
    %cst_46 = arith.constant 0.000000e+00 : f32
    %138 = vector.broadcast %cst_46 : f32 to vector<2x5xf32>
    %139 = arith.subf %138, %137 : vector<2x5xf32>
    %140 = math.exp %139 : vector<2x5xf32>
    %141 = math.log1p %140 : vector<2x5xf32>
    %142 = arith.addf %136, %141 : vector<2x5xf32>
    %143 = vector.shape_cast %142 : vector<2x5xf32> to vector<1x2x5xf32>
    %cst_47 = arith.constant dense<0.000000e+00> : vector<1xf32>
    %144 = vector.multi_reduction <add>, %143, %cst_47 [1, 2] : vector<1x2x5xf32> to vector<1xf32>
    %145 = vector.shape_cast %144 : vector<1xf32> to vector<1x1x1xf32>
    %146 = vector.extract %145[0, 0, 0] : f32 from vector<1x1x1xf32>
    %cst_48 = arith.constant 1.000000e+01 : f32
    %147 = arith.divf %146, %cst_48 : f32
    %148 = vector.broadcast %147 : f32 to vector<1x1xf32>
    %c0_49 = arith.constant 0 : index
    %c0_50 = arith.constant 0 : index
    %149 = vector.load %arg6[%c0_49, %c0_50] : memref<1x1xf32, #tpu.memory_space<vmem>>, vector<1x1xf32>
    tpu.vector_store %arg6[%c0_49, %c0_50], %148 {strides = array<i32>} : memref<1x1xf32, #tpu.memory_space<vmem>>, vector<1x1xf32>,
    return
  }
  func.func @transform_0(%arg0: i32) -> (i32, i32) {
    %c0_i32 = arith.constant 0 : i32
    %c0_i32_0 = arith.constant 0 : i32
    %c0_i32_1 = arith.constant 0 : i32
    return %c0_i32, %c0_i32_0 : i32, i32
  }
  func.func @transform_1(%arg0: i32) -> (i32, i32) {
    %c0_i32 = arith.constant 0 : i32
    %c0_i32_0 = arith.constant 0 : i32
    %c0_i32_1 = arith.constant 0 : i32
    return %c0_i32, %c0_i32_0 : i32, i32
  }
  func.func @transform_2(%arg0: i32) -> (i32, i32) {
    %c0_i32 = arith.constant 0 : i32
    %c0_i32_0 = arith.constant 0 : i32
    %c0_i32_1 = arith.constant 0 : i32
    return %c0_i32, %c0_i32_0 : i32, i32
  }
  func.func @transform_3(%arg0: i32) -> (i32, i32) {
    %c0_i32 = arith.constant 0 : i32
    %c0_i32_0 = arith.constant 0 : i32
    %c0_i32_1 = arith.constant 0 : i32
    return %c0_i32, %c0_i32_0 : i32, i32
  }
  func.func @transform_4(%arg0: i32) -> (i32, i32) {
    %c0_i32 = arith.constant 0 : i32
    %c0_i32_0 = arith.constant 0 : i32
    %c0_i32_1 = arith.constant 0 : i32
    return %c0_i32, %c0_i32_0 : i32, i32
  }
  func.func @transform_5(%arg0: i32) -> (i32, i32) {
    %c0_i32 = arith.constant 0 : i32
    %c0_i32_0 = arith.constant 0 : i32
    %c0_i32_1 = arith.constant 0 : i32
    return %c0_i32, %c0_i32_0 : i32, i32
  }
}

</mosaic_0001>

<llo_original>
// kernel: relation_extractor_forward.1
$region0: #{relation_extractor_forward.1}
  #allocation0 [shape = 'u32[]', space=smem, size = 0x4, offset = 0x4, fixed_abs, tag = 'smem constant byte address 0x4 - core index']
  #allocation1 [shape = 'u32[144,128]{1,0:T(1,128)}', space=vmem, size = 0x12000, scoped, tag = 'internal scratch']
  %s0 = inlined_call_operand.vmem [shape: f32[264,32], index: 0, kind: input, shape index: {}]
  %s1 = inlined_call_operand.vmem [shape: f32[80,32], index: 1, kind: input, shape index: {}]
  %s2 = inlined_call_operand.vmem [shape: s32[24,1], index: 2, kind: input, shape index: {}]
  %s3 = inlined_call_operand.vmem [shape: f32[2,5], index: 3, kind: input, shape index: {}]
  %s4 = inlined_call_operand.hbm [shape: f32[2,5], index: 4, kind: output, shape index: {0}]
  %s5 = inlined_call_operand.hbm [shape: f32[1,1], index: 5, kind: output, shape index: {1}]
  %6 = xla_tuple %s4, %s5
  %s7 = sld [smem:[#allocation0]]
  $region34: #{relation_extractor_forward.1} parent=0
    _
  %s9 = ssub.s32 1, %s7
  %s10 = scalar_select 0, %s9, %s7
  $region1: #{relation_extractor_forward.1} parent=0
    #allocation2 [shape = 'u8[1024]{0}', space=vmem, size = 0x400, scoped, tag = 'output window, operand 0, single buffered']
    #allocation3 [shape = 's32[1]{0}', space=sflag, size = 0x4, scoped, tag = 'scoped memory for relation_extractor_forward.1']
    #allocation4 [shape = 'u8[512]{0}', space=vmem, size = 0x400, scoped, tag = 'output window, operand 1, single buffered']
    #allocation5 [shape = 's32[1]{0}', space=sflag, size = 0x4, scoped, tag = 'scoped memory for relation_extractor_forward.1']
    %11 = vsyncpa [#allocation3], 0
    %12 = vsyncpa [#allocation5], 0
    // Predicated region
    $region2: #{relation_extractor_forward.1} parent=1 // pred_check
      _
    $region3: #{relation_extractor_forward.1} parent=1 // pred_check_branch
      %14 = sbr.rel (0) target = $region5
    $region4: #{relation_extractor_forward.1} parent=1 // pred_region
      _
    $region5: #{relation_extractor_forward.1} parent=1 // pred_fallthru
      _
    // Predicated region
    $region6: #{relation_extractor_forward.1} parent=1 // pred_check
      _
    $region7: #{relation_extractor_forward.1} parent=1 // pred_check_branch
      %16 = sbr.rel (0) target = $region9
    $region8: #{relation_extractor_forward.1} parent=1 // pred_region
      _
    $region9: #{relation_extractor_forward.1} parent=1 // pred_fallthru
      _
    // Predicated region
    $region10: #{relation_extractor_forward.1} parent=1 // pred_check
      _
    $region11: #{relation_extractor_forward.1} parent=1 // pred_check_branch
      %18 = sbr.rel (0) target = $region13
    $region12: #{relation_extractor_forward.1} parent=1 // pred_region
      _
    $region13: #{relation_extractor_forward.1} parent=1 // pred_fallthru
      _
    // Predicated region
    $region14: #{relation_extractor_forward.1} parent=1 // pred_check
      _
    $region15: #{relation_extractor_forward.1} parent=1 // pred_check_branch
      %20 = sbr.rel (0) target = $region17
    $region16: #{relation_extractor_forward.1} parent=1 // pred_region
      _
    $region17: #{relation_extractor_forward.1} parent=1 // pred_fallthru
      _
    %v21 = vld [vmem:[%s1] sm:$0xff]
    %v22 = vld [vmem:[%s1 + $0x8] sm:$0xff]
    %v23 = vld [vmem:[%s1 + $0x10] sm:$0xff]
    %v24 = vld [vmem:[%s1 + $0x18] sm:$0xff]
    %v25 = vld [vmem:[%s1 + $0x20] sm:$0xff]
    %v26 = vld [vmem:[%s1 + $0x28] sm:$0xff]
    %v27 = vld [vmem:[%s1 + $0x30] sm:$0xff]
    %v28 = vld [vmem:[%s1 + $0x38] sm:$0xff]
    %v29 = vld [vmem:[%s1 + $0x40] sm:$0xff]
    %v30 = vld [vmem:[%s1 + $0x48] sm:$0xff]
    %v31 = vld [vmem:[%s0 + $0x100] sm:$0xff]
    %v32 = vld [vmem:[%s2] sm:$0xf]
    %v33 = vld [vmem:[%s2 + $0x8] sm:$0xff]
    %v34 = vld [vmem:[%s2 + $0x10] sm:$0x3]
    %v35 = vld [vmem:[%s0] sm:$0xff]
    %v36 = vld [vmem:[%s0 + $0x8] sm:$0xff]
    %v37 = vld [vmem:[%s0 + $0x10] sm:$0xff]
    %v38 = vld [vmem:[%s0 + $0x18] sm:$0xff]
    %vm39 = vcmask 261120
    %v41 = vsel %vm39, %v21, 0
    %v44 = vsel %vm39, %v22, 0
    %v47 = vsel %vm39, %v23, 0
    %v50 = vsel %vm39, %v24, 0
    %v53 = vsel %vm39, %v25, 0
    %v56 = vsel %vm39, %v26, 0
    %v59 = vsel %vm39, %v27, 0
    %v62 = vsel %vm39, %v28, 0
    %64 = vmatprep.subr.mxu0 0.0
    %65 = vmatpush1.msra.mxu0 %v35
    %66 = vmatprep.subr.mxu0 0.0
    %67 = vmatpush1.msra.mxu0 %v36
    %68 = vmatprep.subr.mxu0 0.0
    %69 = vmatpush1.msra.mxu0 %v37
    %70 = vmatprep.subr.mxu0 0.0
    %71 = vmatpush1.msra.mxu0 %v38
    %72 = vmatprep.subr.mxu0 0.0
    %73 = vmatpush1.msra.mxu0 0.0
    %74 = vmatprep.subr.mxu0 0.0
    %75 = vmatpush1.msra.mxu0 0.0
    %76 = vmatprep.subr.mxu0 0.0
    %77 = vmatpush1.msra.mxu0 0.0
    %78 = vmatprep.subr.mxu0 0.0
    %79 = vmatpush1.msra.mxu0 0.0
    %80 = vmatprep.subr.mxu0 0.0
    %81 = vmatpush1.msra.mxu0 0.0
    %82 = vmatprep.subr.mxu0 0.0
    %83 = vmatpush1.msra.mxu0 0.0
    %84 = vmatprep.subr.mxu0 0.0
    %85 = vmatpush1.msra.mxu0 0.0
    %86 = vmatprep.subr.mxu0 0.0
    %87 = vmatpush1.msra.mxu0 0.0
    %88 = vmatprep.subr.mxu0 0.0
    %89 = vmatpush1.msra.mxu0 0.0
    %90 = vmatprep.subr.mxu0 0.0
    %91 = vmatpush1.msra.mxu0 0.0
    %92 = vmatprep.subr.mxu0 0.0
    %93 = vmatpush1.msra.mxu0 0.0
    %94 = vmatprep.subr.mxu0 0.0
    %95 = vmatpush1.msra.mxu0 0.0
    %96 = vmatprep.subr.mxu0 0.0
    %97 = vmatpush1.msra.mxu0 0.0
    %98 = vmatprep.subr.mxu0 0.0
    %99 = vmatpush1.msra.mxu0 0.0
    %100 = vmatprep.subr.mxu0 0.0
    %101 = vmatpush1.msra.mxu0 0.0
    %102 = vmatprep.subr.mxu0 0.0
    %103 = vmatpush1.msra.mxu0 0.0
    %104 = vmatprep.subr.mxu0 0.0
    %105 = vmatpush1.msra.mxu0 0.0
    %106 = vmatprep.subr.mxu0 0.0
    %107 = vmatpush1.msra.mxu0 0.0
    %108 = vmatprep.subr.mxu0 0.0
    %109 = vmatpush1.msra.mxu0 0.0
    %110 = vmatprep.subr.mxu0 0.0
    %111 = vmatpush1.msra.mxu0 0.0
    %112 = vmatprep.subr.mxu0 0.0
    %113 = vmatpush1.msra.mxu0 0.0
    %114 = vmatprep.subr.mxu0 0.0
    %115 = vmatpush1.msra.mxu0 0.0
    %116 = vmatprep.subr.mxu0 0.0
    %117 = vmatpush1.msra.mxu0 0.0
    %118 = vmatprep.subr.mxu0 0.0
    %119 = vmatpush1.msra.mxu0 0.0
    %120 = vmatprep.subr.mxu0 0.0
    %121 = vmatpush1.msra.mxu0 0.0
    %122 = vmatprep.subr.mxu0 0.0
    %123 = vmatpush1.msra.mxu0 0.0
    %124 = vmatprep.subr.mxu0 0.0
    %125 = vmatpush1.msra.mxu0 0.0
    %126 = vmatprep.subr.mxu0 0.0
    %127 = vmatpush1.msra.mxu0 0.0
    %128 = vmatprep.mubr.f32.mxu0 0.0
    %129 = vmatmul.mubr.f32.gmra.mrb[0].mxu0 %v41
    %v130 = vpop.f32.mrb[0].mxu0
    %v131 = vadd.f32 0.0, %v130
    %v132 = vpop.f32.mrb[0].mxu0
    %133 = vmatprep.mubr.f32.mxu0 0.0
    %134 = vmatmul.mubr.f32.gmra.mrb[0].mxu0 %v44
    %v135 = vpop.f32.mrb[0].mxu0
    %v136 = vadd.f32 0.0, %v135
    %v137 = vpop.f32.mrb[0].mxu0
    %138 = vmatprep.mubr.f32.mxu0 0.0
    %139 = vmatmul.mubr.f32.gmra.mrb[0].mxu0 %v47
    %v140 = vpop.f32.mrb[0].mxu0
    %v141 = vadd.f32 0.0, %v140
    %v142 = vpop.f32.mrb[0].mxu0
    %143 = vmatprep.mubr.f32.mxu0 0.0
    %144 = vmatmul.mubr.f32.gmra.mrb[0].mxu0 %v50
    %v145 = vpop.f32.mrb[0].mxu0
    %v146 = vadd.f32 0.0, %v145
    %v147 = vpop.f32.mrb[0].mxu0
    %148 = vmatprep.mubr.f32.mxu0 0.0
    %149 = vmatmul.mubr.f32.gmra.mrb[0].mxu0 %v53
    %v150 = vpop.f32.mrb[0].mxu0
    %v151 = vadd.f32 0.0, %v150
    %v152 = vpop.f32.mrb[0].mxu0
    %153 = vmatprep.mubr.f32.mxu0 0.0
    %154 = vmatmul.mubr.f32.gmra.mrb[0].mxu0 %v56
    %v155 = vpop.f32.mrb[0].mxu0
    %v156 = vadd.f32 0.0, %v155
    %v157 = vpop.f32.mrb[0].mxu0
    %158 = vmatprep.mubr.f32.mxu0 0.0
    %159 = vmatmul.mubr.f32.gmra.mrb[0].mxu0 %v59
    %v160 = vpop.f32.mrb[0].mxu0
    %v161 = vadd.f32 0.0, %v160
    %v162 = vpop.f32.mrb[0].mxu0
    %163 = vmatprep.mubr.f32.mxu0 0.0
    %164 = vmatmul.mubr.f32.gmra.mrb[0].mxu0 %v62
    %v165 = vpop.f32.mrb[0].mxu0
    %v166 = vadd.f32 0.0, %v165
    %v167 = vpop.f32.mrb[0].mxu0
    %168 = vdwg.mxu0
    %v169 = vtanh.pop %v131
    %v170 = vtanh.pop %v136
    %v171 = vtanh.pop %v141
    %v172 = vtanh.pop %v146
    %v173 = vtanh.pop %v151
    %v174 = vtanh.pop %v156
    %v175 = vtanh.pop %v161
    %v176 = vtanh.pop %v166
    %v177 = vlaneseq
    %v178 = vshrl.u32 %v177, 7
    %v179 = vsub.s32 0, %v178
    %v180 = vrot.slane %v31, %v179
    %v181 = vmul.f32 %v169, %v180
    %v182 = vmul.f32 %v170, %v180
    %v183 = vmul.f32 %v171, %v180
    %v184 = vmul.f32 %v172, %v180
    %v185 = vmul.f32 %v173, %v180
    %v186 = vmul.f32 %v174, %v180
    %v187 = vmul.f32 %v175, %v180
    %v188 = vmul.f32 %v176, %v180
    %v189 = vsel %vm39, %v181, 0.0
    %190 = vadd.xlane.f32.xlu0 %v189
    %v191 = vpop.xlane.xlu0 %190
    %v192 = vsel %vm39, %v182, 0.0
    %193 = vadd.xlane.f32.xlu0 %v192
    %v194 = vpop.xlane.xlu0 %193
    %v195 = vsel %vm39, %v183, 0.0
    %196 = vadd.xlane.f32.xlu0 %v195
    %v197 = vpop.xlane.xlu0 %196
    %v198 = vsel %vm39, %v184, 0.0
    %199 = vadd.xlane.f32.xlu0 %v198
    %v200 = vpop.xlane.xlu0 %199
    %v201 = vsel %vm39, %v185, 0.0
    %202 = vadd.xlane.f32.xlu0 %v201
    %v203 = vpop.xlane.xlu0 %202
    %v204 = vsel %vm39, %v186, 0.0
    %205 = vadd.xlane.f32.xlu0 %v204
    %v206 = vpop.xlane.xlu0 %205
    %v207 = vsel %vm39, %v187, 0.0
    %208 = vadd.xlane.f32.xlu0 %v207
    %v209 = vpop.xlane.xlu0 %208
    %v210 = vsel %vm39, %v188, 0.0
    %211 = vadd.xlane.f32.xlu0 %v210
    %v212 = vpop.xlane.xlu0 %211
    %v213 = vmax.f32 %v191, %v203
    %v214 = vmax.f32 %v194, %v206
    %v215 = vmax.f32 %v197, %v209
    %v216 = vmax.f32 %v200, %v212
    %v217 = vmax.f32 %v213, %v214
    %v218 = vmax.f32 %v215, %v216
    %v219 = vmax.f32 %v217, %v218
    %v220 = vrot.slane %v219, 4
    %v221 = vmax.f32 %v219, %v220
    %v222 = vrot.slane %v221, 2
    %v223 = vmax.f32 %v221, %v222
    %v224 = vrot.slane %v223, 1
    %v225 = vmax.f32 %v223, %v224
    %s226 = vtos %v225
    %v227 = vstv %s226
    %v228 = vsub.f32 %v191, %v227
    %v229 = vsub.f32 %v194, %v227
    %v230 = vsub.f32 %v197, %v227
    %v231 = vsub.f32 %v200, %v227
    %v232 = vsub.f32 %v203, %v227
    %v233 = vsub.f32 %v206, %v227
    %v234 = vsub.f32 %v209, %v227
    %v235 = vsub.f32 %v212, %v227
    %v236 = vmul.f32 %v228, 1.442695
    %v237 = vpow.pop %v236
    %v238 = vmul.f32 %v229, 1.442695
    %v239 = vpow.pop %v238
    %v240 = vmul.f32 %v230, 1.442695
    %v241 = vpow.pop %v240
    %v242 = vmul.f32 %v231, 1.442695
    %v243 = vpow.pop %v242
    %v244 = vmul.f32 %v232, 1.442695
    %v245 = vpow.pop %v244
    %v246 = vmul.f32 %v233, 1.442695
    %v247 = vpow.pop %v246
    %v248 = vmul.f32 %v234, 1.442695
    %v249 = vpow.pop %v248
    %v250 = vmul.f32 %v235, 1.442695
    %v251 = vpow.pop %v250
    %v252 = vlaneseq
    %v253 = vshrl.u32 %v252, 7
    %v254 = vlaneseq
    %v255 = vand.u32 %v254, 127
    %v256 = vmul.u32 %v253, 8
    %vm257 = vcmp.ge.s32.totalorder %v255, %v256
    %258 = vset.pattern.permute.xlu0 0
    %259 = vperm.xlu0 %258, %v33
    %v260 = vpop.permute.xlu0 %259
    %v261 = vadd.s32 %v256, %v260
    %vm262 = vcmp.lt.s32.totalorder %v255, %v261
    %vm263 = vmand %vm257, %vm262
    %v264 = vsel %vm263, 1, 0
    %v265 = vcvt.s32.f32 %v264
    %v266 = vmul.f32 %v237, %v169
    %v267 = vmul.f32 %v239, %v170
    %v268 = vmul.f32 %v241, %v171
    %v269 = vmul.f32 %v243, %v172
    %v270 = vmul.f32 %v245, %v173
    %v271 = vmul.f32 %v247, %v174
    %v272 = vmul.f32 %v249, %v175
    %v273 = vmul.f32 %v251, %v176
    %vm274 = vcmask 523264
    %v276 = vsel %vm274, %v265, 0
    %278 = vmatprep.subr.mxu0 0.0
    %279 = vmatpush1.msra.mxu0 %v266
    %280 = vmatprep.subr.mxu0 0.0
    %281 = vmatpush1.msra.mxu0 %v267
    %282 = vmatprep.subr.mxu0 0.0
    %283 = vmatpush1.msra.mxu0 %v268
    %284 = vmatprep.subr.mxu0 0.0
    %285 = vmatpush1.msra.mxu0 %v269
    %286 = vmatprep.subr.mxu0 0.0
    %287 = vmatpush1.msra.mxu0 %v270
    %288 = vmatprep.subr.mxu0 0.0
    %289 = vmatpush1.msra.mxu0 %v271
    %290 = vmatprep.subr.mxu0 0.0
    %291 = vmatpush1.msra.mxu0 %v272
    %292 = vmatprep.subr.mxu0 0.0
    %293 = vmatpush1.msra.mxu0 %v273
    %294 = vmatprep.subr.mxu0 0.0
    %295 = vmatpush1.msra.mxu0 0.0
    %296 = vmatprep.subr.mxu0 0.0
    %297 = vmatpush1.msra.mxu0 0.0
    %298 = vmatprep.subr.mxu0 0.0
    %299 = vmatpush1.msra.mxu0 0.0
    %300 = vmatprep.subr.mxu0 0.0
    %301 = vmatpush1.msra.mxu0 0.0
    %302 = vmatprep.subr.mxu0 0.0
    %303 = vmatpush1.msra.mxu0 0.0
    %304 = vmatprep.subr.mxu0 0.0
    %305 = vmatpush1.msra.mxu0 0.0
    %306 = vmatprep.subr.mxu0 0.0
    %307 = vmatpush1.msra.mxu0 0.0
    %308 = vmatprep.subr.mxu0 0.0
    %309 = vmatpush1.msra.mxu0 0.0
    %310 = vmatprep.subr.mxu0 0.0
    %311 = vmatpush1.msra.mxu0 0.0
    %312 = vmatprep.subr.mxu0 0.0
    %313 = vmatpush1.msra.mxu0 0.0
    %314 = vmatprep.subr.mxu0 0.0
    %315 = vmatpush1.msra.mxu0 0.0
    %316 = vmatprep.subr.mxu0 0.0
    %317 = vmatpush1.msra.mxu0 0.0
    %318 = vmatprep.subr.mxu0 0.0
    %319 = vmatpush1.msra.mxu0 0.0
    %320 = vmatprep.subr.mxu0 0.0
    %321 = vmatpush1.msra.mxu0 0.0
    %322 = vmatprep.subr.mxu0 0.0
    %323 = vmatpush1.msra.mxu0 0.0
    %324 = vmatprep.subr.mxu0 0.0
    %325 = vmatpush1.msra.mxu0 0.0
    %326 = vmatprep.subr.mxu0 0.0
    %327 = vmatpush1.msra.mxu0 0.0
    %328 = vmatprep.subr.mxu0 0.0
    %329 = vmatpush1.msra.mxu0 0.0
    %330 = vmatprep.subr.mxu0 0.0
    %331 = vmatpush1.msra.mxu0 0.0
    %332 = vmatprep.subr.mxu0 0.0
    %333 = vmatpush1.msra.mxu0 0.0
    %334 = vmatprep.subr.mxu0 0.0
    %335 = vmatpush1.msra.mxu0 0.0
    %336 = vmatprep.subr.mxu0 0.0
    %337 = vmatpush1.msra.mxu0 0.0
    %338 = vmatprep.subr.mxu0 0.0
    %339 = vmatpush1.msra.mxu0 0.0
    %340 = vmatprep.subr.mxu0 0.0
    %341 = vmatpush1.msra.mxu0 0.0
    %342 = vmatprep.mubr.f32.mxu0 0.0
    %343 = vmatmul.mubr.f32.gmra.mrb[0].mxu0 %v276
    %v344 = vpop.f32.mrb[0].mxu0
    %v345 = vadd.f32 0.0, %v344
    %v346 = vpop.f32.mrb[0].mxu0
    %347 = vdwg.mxu0
    %348 = vmatprep.subr.mxu0 0.0
    %349 = vmatpush1.msra.mxu0 %v237
    %350 = vmatprep.subr.mxu0 0.0
    %351 = vmatpush1.msra.mxu0 %v239
    %352 = vmatprep.subr.mxu0 0.0
    %353 = vmatpush1.msra.mxu0 %v241
    %354 = vmatprep.subr.mxu0 0.0
    %355 = vmatpush1.msra.mxu0 %v243
    %356 = vmatprep.subr.mxu0 0.0
    %357 = vmatpush1.msra.mxu0 %v245
    %358 = vmatprep.subr.mxu0 0.0
    %359 = vmatpush1.msra.mxu0 %v247
    %360 = vmatprep.subr.mxu0 0.0
    %361 = vmatpush1.msra.mxu0 %v249
    %362 = vmatprep.subr.mxu0 0.0
    %363 = vmatpush1.msra.mxu0 %v251
    %364 = vmatprep.subr.mxu0 0.0
    %365 = vmatpush1.msra.mxu0 0.0
    %366 = vmatprep.subr.mxu0 0.0
    %367 = vmatpush1.msra.mxu0 0.0
    %368 = vmatprep.subr.mxu0 0.0
    %369 = vmatpush1.msra.mxu0 0.0
    %370 = vmatprep.subr.mxu0 0.0
    %371 = vmatpush1.msra.mxu0 0.0
    %372 = vmatprep.subr.mxu0 0.0
    %373 = vmatpush1.msra.mxu0 0.0
    %374 = vmatprep.subr.mxu0 0.0
    %375 = vmatpush1.msra.mxu0 0.0
    %376 = vmatprep.subr.mxu0 0.0
    %377 = vmatpush1.msra.mxu0 0.0
    %378 = vmatprep.subr.mxu0 0.0
    %379 = vmatpush1.msra.mxu0 0.0
    %380 = vmatprep.subr.mxu0 0.0
    %381 = vmatpush1.msra.mxu0 0.0
    %382 = vmatprep.subr.mxu0 0.0
    %383 = vmatpush1.msra.mxu0 0.0
    %384 = vmatprep.subr.mxu0 0.0
    %385 = vmatpush1.msra.mxu0 0.0
    %386 = vmatprep.subr.mxu0 0.0
    %387 = vmatpush1.msra.mxu0 0.0
    %388 = vmatprep.subr.mxu0 0.0
    %389 = vmatpush1.msra.mxu0 0.0
    %390 = vmatprep.subr.mxu0 0.0
    %391 = vmatpush1.msra.mxu0 0.0
    %392 = vmatprep.subr.mxu0 0.0
    %393 = vmatpush1.msra.mxu0 0.0
    %394 = vmatprep.subr.mxu0 0.0
    %395 = vmatpush1.msra.mxu0 0.0
    %396 = vmatprep.subr.mxu0 0.0
    %397 = vmatpush1.msra.mxu0 0.0
    %398 = vmatprep.subr.mxu0 0.0
    %399 = vmatpush1.msra.mxu0 0.0
    %400 = vmatprep.subr.mxu0 0.0
    %401 = vmatpush1.msra.mxu0 0.0
    %402 = vmatprep.subr.mxu0 0.0
    %403 = vmatpush1.msra.mxu0 0.0
    %404 = vmatprep.subr.mxu0 0.0
    %405 = vmatpush1.msra.mxu0 0.0
    %406 = vmatprep.subr.mxu0 0.0
    %407 = vmatpush1.msra.mxu0 0.0
    %408 = vmatprep.subr.mxu0 0.0
    %409 = vmatpush1.msra.mxu0 0.0
    %410 = vmatprep.subr.mxu0 0.0
    %411 = vmatpush1.msra.mxu0 0.0
    %412 = vmatprep.mubr.f32.mxu0 0.0
    %413 = vmatmul.mubr.f32.gmra.mrb[0].mxu0 %v276
    %v414 = vpop.f32.mrb[0].mxu0
    %v415 = vadd.f32 0.0, %v414
    %v416 = vpop.f32.mrb[0].mxu0
    %417 = vdwg.mxu0
    %419 = vset.pattern.permute.xlu0 0
    %420 = vperm.xlu0 %419, %v415
    %v421 = vpop.permute.xlu0 %420
    %v423 = vrcp.pop %v421
    %v424 = vmul.f32 %v345, %v423
    %v425 = vld [vmem:[%s0 + $0x20] sm:$0xff]
    %v426 = vld [vmem:[%s0 + $0x28] sm:$0xff]
    %v427 = vld [vmem:[%s0 + $0x30] sm:$0xff]
    %v428 = vld [vmem:[%s0 + $0x38] sm:$0xff]
    %v430 = vsel %vm39, %v29, 0
    %432 = vmatprep.subr.mxu0 0.0
    %433 = vmatpush1.msra.mxu0 %v425
    %434 = vmatprep.subr.mxu0 0.0
    %435 = vmatpush1.msra.mxu0 %v426
    %436 = vmatprep.subr.mxu0 0.0
    %437 = vmatpush1.msra.mxu0 %v427
    %438 = vmatprep.subr.mxu0 0.0
    %439 = vmatpush1.msra.mxu0 %v428
    %440 = vmatprep.subr.mxu0 0.0
    %441 = vmatpush1.msra.mxu0 0.0
    %442 = vmatprep.subr.mxu0 0.0
    %443 = vmatpush1.msra.mxu0 0.0
    %444 = vmatprep.subr.mxu0 0.0
    %445 = vmatpush1.msra.mxu0 0.0
    %446 = vmatprep.subr.mxu0 0.0
    %447 = vmatpush1.msra.mxu0 0.0
    %448 = vmatprep.subr.mxu0 0.0
    %449 = vmatpush1.msra.mxu0 0.0
    %450 = vmatprep.subr.mxu0 0.0
    %451 = vmatpush1.msra.mxu0 0.0
    %452 = vmatprep.subr.mxu0 0.0
    %453 = vmatpush1.msra.mxu0 0.0
    %454 = vmatprep.subr.mxu0 0.0
    %455 = vmatpush1.msra.mxu0 0.0
    %456 = vmatprep.subr.mxu0 0.0
    %457 = vmatpush1.msra.mxu0 0.0
    %458 = vmatprep.subr.mxu0 0.0
    %459 = vmatpush1.msra.mxu0 0.0
    %460 = vmatprep.subr.mxu0 0.0
    %461 = vmatpush1.msra.mxu0 0.0
    %462 = vmatprep.subr.mxu0 0.0
    %463 = vmatpush1.msra.mxu0 0.0
    %464 = vmatprep.subr.mxu0 0.0
    %465 = vmatpush1.msra.mxu0 0.0
    %466 = vmatprep.subr.mxu0 0.0
    %467 = vmatpush1.msra.mxu0 0.0
    %468 = vmatprep.subr.mxu0 0.0
    %469 = vmatpush1.msra.mxu0 0.0
    %470 = vmatprep.subr.mxu0 0.0
    %471 = vmatpush1.msra.mxu0 0.0
    %472 = vmatprep.subr.mxu0 0.0
    %473 = vmatpush1.msra.mxu0 0.0
    %474 = vmatprep.subr.mxu0 0.0
    %475 = vmatpush1.msra.mxu0 0.0
    %476 = vmatprep.subr.mxu0 0.0
    %477 = vmatpush1.msra.mxu0 0.0
    %478 = vmatprep.subr.mxu0 0.0
    %479 = vmatpush1.msra.mxu0 0.0
    %480 = vmatprep.subr.mxu0 0.0
    %481 = vmatpush1.msra.mxu0 0.0
    %482 = vmatprep.subr.mxu0 0.0
    %483 = vmatpush1.msra.mxu0 0.0
    %484 = vmatprep.subr.mxu0 0.0
    %485 = vmatpush1.msra.mxu0 0.0
    %486 = vmatprep.subr.mxu0 0.0
    %487 = vmatpush1.msra.mxu0 0.0
    %488 = vmatprep.subr.mxu0 0.0
    %489 = vmatpush1.msra.mxu0 0.0
    %490 = vmatprep.subr.mxu0 0.0
    %491 = vmatpush1.msra.mxu0 0.0
    %492 = vmatprep.subr.mxu0 0.0
    %493 = vmatpush1.msra.mxu0 0.0
    %494 = vmatprep.subr.mxu0 0.0
    %495 = vmatpush1.msra.mxu0 0.0
    %496 = vmatprep.mubr.f32.mxu0 0.0
    %497 = vmatmul.mubr.f32.gmra.mrb[0].mxu0 %v430
    %v498 = vpop.f32.mrb[0].mxu0
    %v499 = vadd.f32 0.0, %v498
    %v500 = vpop.f32.mrb[0].mxu0
    %501 = vdwg.mxu0
    %v502 = vadd.f32 %v424, %v499
    %v503 = vld [vmem:[%s0 + $0x40] sm:$0xff]
    %v504 = vld [vmem:[%s0 + $0x48] sm:$0xff]
    %v505 = vld [vmem:[%s0 + $0x50] sm:$0xff]
    %v506 = vld [vmem:[%s0 + $0x58] sm:$0xff]
    %v508 = vsel %vm39, %v30, 0
    %510 = vmatprep.subr.mxu0 0.0
    %511 = vmatpush1.msra.mxu0 %v503
    %512 = vmatprep.subr.mxu0 0.0
    %513 = vmatpush1.msra.mxu0 %v504
    %514 = vmatprep.subr.mxu0 0.0
    %515 = vmatpush1.msra.mxu0 %v505
    %516 = vmatprep.subr.mxu0 0.0
    %517 = vmatpush1.msra.mxu0 %v506
    %518 = vmatprep.subr.mxu0 0.0
    %519 = vmatpush1.msra.mxu0 0.0
    %520 = vmatprep.subr.mxu0 0.0
    %521 = vmatpush1.msra.mxu0 0.0
    %522 = vmatprep.subr.mxu0 0.0
    %523 = vmatpush1.msra.mxu0 0.0
    %524 = vmatprep.subr.mxu0 0.0
    %525 = vmatpush1.msra.mxu0 0.0
    %526 = vmatprep.subr.mxu0 0.0
    %527 = vmatpush1.msra.mxu0 0.0
    %528 = vmatprep.subr.mxu0 0.0
    %529 = vmatpush1.msra.mxu0 0.0
    %530 = vmatprep.subr.mxu0 0.0
    %531 = vmatpush1.msra.mxu0 0.0
    %532 = vmatprep.subr.mxu0 0.0
    %533 = vmatpush1.msra.mxu0 0.0
    %534 = vmatprep.subr.mxu0 0.0
    %535 = vmatpush1.msra.mxu0 0.0
    %536 = vmatprep.subr.mxu0 0.0
    %537 = vmatpush1.msra.mxu0 0.0
    %538 = vmatprep.subr.mxu0 0.0
    %539 = vmatpush1.msra.mxu0 0.0
    %540 = vmatprep.subr.mxu0 0.0
    %541 = vmatpush1.msra.mxu0 0.0
    %542 = vmatprep.subr.mxu0 0.0
    %543 = vmatpush1.msra.mxu0 0.0
    %544 = vmatprep.subr.mxu0 0.0
    %545 = vmatpush1.msra.mxu0 0.0
    %546 = vmatprep.subr.mxu0 0.0
    %547 = vmatpush1.msra.mxu0 0.0
    %548 = vmatprep.subr.mxu0 0.0
    %549 = vmatpush1.msra.mxu0 0.0
    %550 = vmatprep.subr.mxu0 0.0
    %551 = vmatpush1.msra.mxu0 0.0
    %552 = vmatprep.subr.mxu0 0.0
    %553 = vmatpush1.msra.mxu0 0.0
    %554 = vmatprep.subr.mxu0 0.0
    %555 = vmatpush1.msra.mxu0 0.0
    %556 = vmatprep.subr.mxu0 0.0
    %557 = vmatpush1.msra.mxu0 0.0
    %558 = vmatprep.subr.mxu0 0.0
    %559 = vmatpush1.msra.mxu0 0.0
    %560 = vmatprep.subr.mxu0 0.0
    %561 = vmatpush1.msra.mxu0 0.0
    %562 = vmatprep.subr.mxu0 0.0
    %563 = vmatpush1.msra.mxu0 0.0
    %564 = vmatprep.subr.mxu0 0.0
    %565 = vmatpush1.msra.mxu0 0.0
    %566 = vmatprep.subr.mxu0 0.0
    %567 = vmatpush1.msra.mxu0 0.0
    %568 = vmatprep.subr.mxu0 0.0
    %569 = vmatpush1.msra.mxu0 0.0
    %570 = vmatprep.subr.mxu0 0.0
    %571 = vmatpush1.msra.mxu0 0.0
    %572 = vmatprep.subr.mxu0 0.0
    %573 = vmatpush1.msra.mxu0 0.0
    %574 = vmatprep.mubr.f32.mxu0 0.0
    %575 = vmatmul.mubr.f32.gmra.mrb[0].mxu0 %v508
    %v576 = vpop.f32.mrb[0].mxu0
    %v577 = vadd.f32 0.0, %v576
    %v578 = vpop.f32.mrb[0].mxu0
    %579 = vdwg.mxu0
    %v580 = vadd.f32 %v502, %v577
    %v581 = vld [vmem:[%s0 + $0x60] sm:$0xff]
    %v582 = vld [vmem:[%s0 + $0x68] sm:$0xff]
    %v583 = vld [vmem:[%s0 + $0x70] sm:$0xff]
    %v584 = vld [vmem:[%s0 + $0x78] sm:$0xff]
    %v586 = vsel %vm39, %v580, 0
    %588 = vmatprep.subr.mxu0 0.0
    %589 = vmatpush1.msra.mxu0 %v581
    %590 = vmatprep.subr.mxu0 0.0
    %591 = vmatpush1.msra.mxu0 %v582
    %592 = vmatprep.subr.mxu0 0.0
    %593 = vmatpush1.msra.mxu0 %v583
    %594 = vmatprep.subr.mxu0 0.0
    %595 = vmatpush1.msra.mxu0 %v584
    %596 = vmatprep.subr.mxu0 0.0
    %597 = vmatpush1.msra.mxu0 0.0
    %598 = vmatprep.subr.mxu0 0.0
    %599 = vmatpush1.msra.mxu0 0.0
    %600 = vmatprep.subr.mxu0 0.0
    %601 = vmatpush1.msra.mxu0 0.0
    %602 = vmatprep.subr.mxu0 0.0
    %603 = vmatpush1.msra.mxu0 0.0
    %604 = vmatprep.subr.mxu0 0.0
    %605 = vmatpush1.msra.mxu0 0.0
    %606 = vmatprep.subr.mxu0 0.0
    %607 = vmatpush1.msra.mxu0 0.0
    %608 = vmatprep.subr.mxu0 0.0
    %609 = vmatpush1.msra.mxu0 0.0
    %610 = vmatprep.subr.mxu0 0.0
    %611 = vmatpush1.msra.mxu0 0.0
    %612 = vmatprep.subr.mxu0 0.0
    %613 = vmatpush1.msra.mxu0 0.0
    %614 = vmatprep.subr.mxu0 0.0
    %615 = vmatpush1.msra.mxu0 0.0
    %616 = vmatprep.subr.mxu0 0.0
    %617 = vmatpush1.msra.mxu0 0.0
    %618 = vmatprep.subr.mxu0 0.0
    %619 = vmatpush1.msra.mxu0 0.0
    %620 = vmatprep.subr.mxu0 0.0
    %621 = vmatpush1.msra.mxu0 0.0
    %622 = vmatprep.subr.mxu0 0.0
    %623 = vmatpush1.msra.mxu0 0.0
    %624 = vmatprep.subr.mxu0 0.0
    %625 = vmatpush1.msra.mxu0 0.0
    %626 = vmatprep.subr.mxu0 0.0
    %627 = vmatpush1.msra.mxu0 0.0
    %628 = vmatprep.subr.mxu0 0.0
    %629 = vmatpush1.msra.mxu0 0.0
    %630 = vmatprep.subr.mxu0 0.0
    %631 = vmatpush1.msra.mxu0 0.0
    %632 = vmatprep.subr.mxu0 0.0
    %633 = vmatpush1.msra.mxu0 0.0
    %634 = vmatprep.subr.mxu0 0.0
    %635 = vmatpush1.msra.mxu0 0.0
    %636 = vmatprep.subr.mxu0 0.0
    %637 = vmatpush1.msra.mxu0 0.0
    %638 = vmatprep.subr.mxu0 0.0
    %639 = vmatpush1.msra.mxu0 0.0
    %640 = vmatprep.subr.mxu0 0.0
    %641 = vmatpush1.msra.mxu0 0.0
    %642 = vmatprep.subr.mxu0 0.0
    %643 = vmatpush1.msra.mxu0 0.0
    %644 = vmatprep.subr.mxu0 0.0
    %645 = vmatpush1.msra.mxu0 0.0
    %646 = vmatprep.subr.mxu0 0.0
    %647 = vmatpush1.msra.mxu0 0.0
    %648 = vmatprep.subr.mxu0 0.0
    %649 = vmatpush1.msra.mxu0 0.0
    %650 = vmatprep.subr.mxu0 0.0
    %651 = vmatpush1.msra.mxu0 0.0
    %652 = vmatprep.mubr.f32.mxu0 0.0
    %653 = vmatmul.mubr.f32.gmra.mrb[0].mxu0 %v586
    %v654 = vpop.f32.mrb[0].mxu0
    %v655 = vadd.f32 0.0, %v654
    %v656 = vpop.f32.mrb[0].mxu0
    %657 = vdwg.mxu0
    %v658 = vtanh.pop %v655
    %v659 = vlaneseq
    %v660 = vshrl.u32 %v659, 7
    %v661 = vsub.s32 1, %v660
    %v662 = vrot.slane %v31, %v661
    %v663 = vmul.f32 %v658, %v662
    %v664 = vsel %vm39, %v663, 0.0
    %665 = vadd.xlane.f32.xlu0 %v664
    %v666 = vpop.xlane.xlu0 %665
    %v667 = vrot.slane %v666, 4
    %v668 = vmax.f32 %v666, %v667
    %v669 = vrot.slane %v668, 2
    %v670 = vmax.f32 %v668, %v669
    %v671 = vrot.slane %v670, 1
    %v672 = vmax.f32 %v670, %v671
    %s673 = vtos %v672
    %v674 = vstv %s673
    %v675 = vsub.f32 %v666, %v674
    %v676 = vmul.f32 %v675, 1.442695
    %v677 = vpow.pop %v676
    %v678 = vmul.u32 %v253, 4
    %vm679 = vcmp.ge.s32.totalorder %v255, %v678
    %680 = vset.pattern.permute.xlu0 0
    %681 = vperm.xlu0 %680, %v34
    %v682 = vpop.permute.xlu0 %681
    %v683 = vadd.s32 %v678, %v682
    %vm684 = vcmp.lt.s32.totalorder %v255, %v683
    %vm685 = vmand %vm679, %vm684
    %v686 = vsel %vm685, 1, 0
    %v687 = vcvt.s32.f32 %v686
    %v688 = vmul.f32 %v677, %v580
    %vm689 = vcmask 64512
    %v691 = vsel %vm689, %v687, 0
    %693 = vmatprep.subr.mxu0 0.0
    %694 = vmatpush1.msra.mxu0 %v688
    %695 = vmatprep.subr.mxu0 0.0
    %696 = vmatpush1.msra.mxu0 0.0
    %697 = vmatprep.subr.mxu0 0.0
    %698 = vmatpush1.msra.mxu0 0.0
    %699 = vmatprep.subr.mxu0 0.0
    %700 = vmatpush1.msra.mxu0 0.0
    %701 = vmatprep.subr.mxu0 0.0
    %702 = vmatpush1.msra.mxu0 0.0
    %703 = vmatprep.subr.mxu0 0.0
    %704 = vmatpush1.msra.mxu0 0.0
    %705 = vmatprep.subr.mxu0 0.0
    %706 = vmatpush1.msra.mxu0 0.0
    %707 = vmatprep.subr.mxu0 0.0
    %708 = vmatpush1.msra.mxu0 0.0
    %709 = vmatprep.subr.mxu0 0.0
    %710 = vmatpush1.msra.mxu0 0.0
    %711 = vmatprep.subr.mxu0 0.0
    %712 = vmatpush1.msra.mxu0 0.0
    %713 = vmatprep.subr.mxu0 0.0
    %714 = vmatpush1.msra.mxu0 0.0
    %715 = vmatprep.subr.mxu0 0.0
    %716 = vmatpush1.msra.mxu0 0.0
    %717 = vmatprep.subr.mxu0 0.0
    %718 = vmatpush1.msra.mxu0 0.0
    %719 = vmatprep.subr.mxu0 0.0
    %720 = vmatpush1.msra.mxu0 0.0
    %721 = vmatprep.subr.mxu0 0.0
    %722 = vmatpush1.msra.mxu0 0.0
    %723 = vmatprep.subr.mxu0 0.0
    %724 = vmatpush1.msra.mxu0 0.0
    %725 = vmatprep.subr.mxu0 0.0
    %726 = vmatpush1.msra.mxu0 0.0
    %727 = vmatprep.subr.mxu0 0.0
    %728 = vmatpush1.msra.mxu0 0.0
    %729 = vmatprep.subr.mxu0 0.0
    %730 = vmatpush1.msra.mxu0 0.0
    %731 = vmatprep.subr.mxu0 0.0
    %732 = vmatpush1.msra.mxu0 0.0
    %733 = vmatprep.subr.mxu0 0.0
    %734 = vmatpush1.msra.mxu0 0.0
    %735 = vmatprep.subr.mxu0 0.0
    %736 = vmatpush1.msra.mxu0 0.0
    %737 = vmatprep.subr.mxu0 0.0
    %738 = vmatpush1.msra.mxu0 0.0
    %739 = vmatprep.subr.mxu0 0.0
    %740 = vmatpush1.msra.mxu0 0.0
    %741 = vmatprep.subr.mxu0 0.0
    %742 = vmatpush1.msra.mxu0 0.0
    %743 = vmatprep.subr.mxu0 0.0
    %744 = vmatpush1.msra.mxu0 0.0
    %745 = vmatprep.subr.mxu0 0.0
    %746 = vmatpush1.msra.mxu0 0.0
    %747 = vmatprep.subr.mxu0 0.0
    %748 = vmatpush1.msra.mxu0 0.0
    %749 = vmatprep.subr.mxu0 0.0
    %750 = vmatpush1.msra.mxu0 0.0
    %751 = vmatprep.subr.mxu0 0.0
    %752 = vmatpush1.msra.mxu0 0.0
    %753 = vmatprep.subr.mxu0 0.0
    %754 = vmatpush1.msra.mxu0 0.0
    %755 = vmatprep.subr.mxu0 0.0
    %756 = vmatpush1.msra.mxu0 0.0
    %757 = vmatprep.mubr.f32.mxu0 0.0
    %758 = vmatmul.mubr.f32.gmra.mrb[0].mxu0 %v691
    %v759 = vpop.f32.mrb[0].mxu0
    %v760 = vadd.f32 0.0, %v759
    %v761 = vpop.f32.mrb[0].mxu0
    %762 = vdwg.mxu0
    %763 = vmatprep.subr.mxu0 0.0
    %764 = vmatpush1.msra.mxu0 %v677
    %765 = vmatprep.subr.mxu0 0.0
    %766 = vmatpush1.msra.mxu0 0.0
    %767 = vmatprep.subr.mxu0 0.0
    %768 = vmatpush1.msra.mxu0 0.0
    %769 = vmatprep.subr.mxu0 0.0
    %770 = vmatpush1.msra.mxu0 0.0
    %771 = vmatprep.subr.mxu0 0.0
    %772 = vmatpush1.msra.mxu0 0.0
    %773 = vmatprep.subr.mxu0 0.0
    %774 = vmatpush1.msra.mxu0 0.0
    %775 = vmatprep.subr.mxu0 0.0
    %776 = vmatpush1.msra.mxu0 0.0
    %777 = vmatprep.subr.mxu0 0.0
    %778 = vmatpush1.msra.mxu0 0.0
    %779 = vmatprep.subr.mxu0 0.0
    %780 = vmatpush1.msra.mxu0 0.0
    %781 = vmatprep.subr.mxu0 0.0
    %782 = vmatpush1.msra.mxu0 0.0
    %783 = vmatprep.subr.mxu0 0.0
    %784 = vmatpush1.msra.mxu0 0.0
    %785 = vmatprep.subr.mxu0 0.0
    %786 = vmatpush1.msra.mxu0 0.0
    %787 = vmatprep.subr.mxu0 0.0
    %788 = vmatpush1.msra.mxu0 0.0
    %789 = vmatprep.subr.mxu0 0.0
    %790 = vmatpush1.msra.mxu0 0.0
    %791 = vmatprep.subr.mxu0 0.0
    %792 = vmatpush1.msra.mxu0 0.0
    %793 = vmatprep.subr.mxu0 0.0
    %794 = vmatpush1.msra.mxu0 0.0
    %795 = vmatprep.subr.mxu0 0.0
    %796 = vmatpush1.msra.mxu0 0.0
    %797 = vmatprep.subr.mxu0 0.0
    %798 = vmatpush1.msra.mxu0 0.0
    %799 = vmatprep.subr.mxu0 0.0
    %800 = vmatpush1.msra.mxu0 0.0
    %801 = vmatprep.subr.mxu0 0.0
    %802 = vmatpush1.msra.mxu0 0.0
    %803 = vmatprep.subr.mxu0 0.0
    %804 = vmatpush1.msra.mxu0 0.0
    %805 = vmatprep.subr.mxu0 0.0
    %806 = vmatpush1.msra.mxu0 0.0
    %807 = vmatprep.subr.mxu0 0.0
    %808 = vmatpush1.msra.mxu0 0.0
    %809 = vmatprep.subr.mxu0 0.0
    %810 = vmatpush1.msra.mxu0 0.0
    %811 = vmatprep.subr.mxu0 0.0
    %812 = vmatpush1.msra.mxu0 0.0
    %813 = vmatprep.subr.mxu0 0.0
    %814 = vmatpush1.msra.mxu0 0.0
    %815 = vmatprep.subr.mxu0 0.0
    %816 = vmatpush1.msra.mxu0 0.0
    %817 = vmatprep.subr.mxu0 0.0
    %818 = vmatpush1.msra.mxu0 0.0
    %819 = vmatprep.subr.mxu0 0.0
    %820 = vmatpush1.msra.mxu0 0.0
    %821 = vmatprep.subr.mxu0 0.0
    %822 = vmatpush1.msra.mxu0 0.0
    %823 = vmatprep.subr.mxu0 0.0
    %824 = vmatpush1.msra.mxu0 0.0
    %825 = vmatprep.subr.mxu0 0.0
    %826 = vmatpush1.msra.mxu0 0.0
    %827 = vmatprep.mubr.f32.mxu0 0.0
    %828 = vmatmul.mubr.f32.gmra.mrb[0].mxu0 %v691
    %v829 = vpop.f32.mrb[0].mxu0
    %v830 = vadd.f32 0.0, %v829
    %v831 = vpop.f32.mrb[0].mxu0
    %832 = vdwg.mxu0
    %834 = vset.pattern.permute.xlu0 0
    %835 = vperm.xlu0 %834, %v830
    %v836 = vpop.permute.xlu0 %835
    %v838 = vrcp.pop %v836
    %v839 = vmul.f32 %v760, %v838
    %840 = vset.pattern.permute.xlu0 0
    %841 = vperm.xlu0 %840, %v32
    %v842 = vpop.permute.xlu0 %841
    %vm843 = vcmp.eq.s32.totalorder %v255, %v842
    %v844 = vsel %vm843, 1, 0
    %v845 = vcvt.s32.f32 %v844
    %v847 = vsel %vm274, %v845, 0
    %849 = vmatprep.subr.mxu0 0.0
    %850 = vmatpush1.msra.mxu0 %v169
    %851 = vmatprep.subr.mxu0 0.0
    %852 = vmatpush1.msra.mxu0 %v170
    %853 = vmatprep.subr.mxu0 0.0
    %854 = vmatpush1.msra.mxu0 %v171
    %855 = vmatprep.subr.mxu0 0.0
    %856 = vmatpush1.msra.mxu0 %v172
    %857 = vmatprep.subr.mxu0 0.0
    %858 = vmatpush1.msra.mxu0 %v173
    %859 = vmatprep.subr.mxu0 0.0
    %860 = vmatpush1.msra.mxu0 %v174
    %861 = vmatprep.subr.mxu0 0.0
    %862 = vmatpush1.msra.mxu0 %v175
    %863 = vmatprep.subr.mxu0 0.0
    %864 = vmatpush1.msra.mxu0 %v176
    %865 = vmatprep.subr.mxu0 0.0
    %866 = vmatpush1.msra.mxu0 0.0
    %867 = vmatprep.subr.mxu0 0.0
    %868 = vmatpush1.msra.mxu0 0.0
    %869 = vmatprep.subr.mxu0 0.0
    %870 = vmatpush1.msra.mxu0 0.0
    %871 = vmatprep.subr.mxu0 0.0
    %872 = vmatpush1.msra.mxu0 0.0
    %873 = vmatprep.subr.mxu0 0.0
    %874 = vmatpush1.msra.mxu0 0.0
    %875 = vmatprep.subr.mxu0 0.0
    %876 = vmatpush1.msra.mxu0 0.0
    %877 = vmatprep.subr.mxu0 0.0
    %878 = vmatpush1.msra.mxu0 0.0
    %879 = vmatprep.subr.mxu0 0.0
    %880 = vmatpush1.msra.mxu0 0.0
    %881 = vmatprep.subr.mxu0 0.0
    %882 = vmatpush1.msra.mxu0 0.0
    %883 = vmatprep.subr.mxu0 0.0
    %884 = vmatpush1.msra.mxu0 0.0
    %885 = vmatprep.subr.mxu0 0.0
    %886 = vmatpush1.msra.mxu0 0.0
    %887 = vmatprep.subr.mxu0 0.0
    %888 = vmatpush1.msra.mxu0 0.0
    %889 = vmatprep.subr.mxu0 0.0
    %890 = vmatpush1.msra.mxu0 0.0
    %891 = vmatprep.subr.mxu0 0.0
    %892 = vmatpush1.msra.mxu0 0.0
    %893 = vmatprep.subr.mxu0 0.0
    %894 = vmatpush1.msra.mxu0 0.0
    %895 = vmatprep.subr.mxu0 0.0
    %896 = vmatpush1.msra.mxu0 0.0
    %897 = vmatprep.subr.mxu0 0.0
    %898 = vmatpush1.msra.mxu0 0.0
    %899 = vmatprep.subr.mxu0 0.0
    %900 = vmatpush1.msra.mxu0 0.0
    %901 = vmatprep.subr.mxu0 0.0
    %902 = vmatpush1.msra.mxu0 0.0
    %903 = vmatprep.subr.mxu0 0.0
    %904 = vmatpush1.msra.mxu0 0.0
    %905 = vmatprep.subr.mxu0 0.0
    %906 = vmatpush1.msra.mxu0 0.0
    %907 = vmatprep.subr.mxu0 0.0
    %908 = vmatpush1.msra.mxu0 0.0
    %909 = vmatprep.subr.mxu0 0.0
    %910 = vmatpush1.msra.mxu0 0.0
    %911 = vmatprep.subr.mxu0 0.0
    %912 = vmatpush1.msra.mxu0 0.0
    %913 = vmatprep.mubr.f32.mxu0 0.0
    %914 = vmatmul.mubr.f32.gmra.mrb[0].mxu0 %v847
    %v915 = vpop.f32.mrb[0].mxu0
    %v916 = vadd.f32 0.0, %v915
    %v917 = vpop.f32.mrb[0].mxu0
    %918 = vdwg.mxu0
    %v919 = vld [vmem:[%s0 + $0x80] sm:$0xff]
    %v920 = vld [vmem:[%s0 + $0x88] sm:$0xff]
    %v921 = vld [vmem:[%s0 + $0x90] sm:$0xff]
    %v922 = vld [vmem:[%s0 + $0x98] sm:$0xff]
    %v923 = vld [vmem:[%s0 + $0xa0] sm:$0xff]
    %v924 = vld [vmem:[%s0 + $0xa8] sm:$0xff]
    %v925 = vld [vmem:[%s0 + $0xb0] sm:$0xff]
    %v926 = vld [vmem:[%s0 + $0xb8] sm:$0xff]
    %v928 = vsel %vm39, %v916, 0
    %930 = vmatprep.subr.mxu0 0.0
    %931 = vmatpush1.msra.mxu0 %v923
    %932 = vmatprep.subr.mxu0 0.0
    %933 = vmatpush1.msra.mxu0 %v924
    %934 = vmatprep.subr.mxu0 0.0
    %935 = vmatpush1.msra.mxu0 %v925
    %936 = vmatprep.subr.mxu0 0.0
    %937 = vmatpush1.msra.mxu0 %v926
    %938 = vmatprep.subr.mxu0 0.0
    %939 = vmatpush1.msra.mxu0 0.0
    %940 = vmatprep.subr.mxu0 0.0
    %941 = vmatpush1.msra.mxu0 0.0
    %942 = vmatprep.subr.mxu0 0.0
    %943 = vmatpush1.msra.mxu0 0.0
    %944 = vmatprep.subr.mxu0 0.0
    %945 = vmatpush1.msra.mxu0 0.0
    %946 = vmatprep.subr.mxu0 0.0
    %947 = vmatpush1.msra.mxu0 0.0
    %948 = vmatprep.subr.mxu0 0.0
    %949 = vmatpush1.msra.mxu0 0.0
    %950 = vmatprep.subr.mxu0 0.0
    %951 = vmatpush1.msra.mxu0 0.0
    %952 = vmatprep.subr.mxu0 0.0
    %953 = vmatpush1.msra.mxu0 0.0
    %954 = vmatprep.subr.mxu0 0.0
    %955 = vmatpush1.msra.mxu0 0.0
    %956 = vmatprep.subr.mxu0 0.0
    %957 = vmatpush1.msra.mxu0 0.0
    %958 = vmatprep.subr.mxu0 0.0
    %959 = vmatpush1.msra.mxu0 0.0
    %960 = vmatprep.subr.mxu0 0.0
    %961 = vmatpush1.msra.mxu0 0.0
    %962 = vmatprep.subr.mxu0 0.0
    %963 = vmatpush1.msra.mxu0 0.0
    %964 = vmatprep.subr.mxu0 0.0
    %965 = vmatpush1.msra.mxu0 0.0
    %966 = vmatprep.subr.mxu0 0.0
    %967 = vmatpush1.msra.mxu0 0.0
    %968 = vmatprep.subr.mxu0 0.0
    %969 = vmatpush1.msra.mxu0 0.0
    %970 = vmatprep.subr.mxu0 0.0
    %971 = vmatpush1.msra.mxu0 0.0
    %972 = vmatprep.subr.mxu0 0.0
    %973 = vmatpush1.msra.mxu0 0.0
    %974 = vmatprep.subr.mxu0 0.0
    %975 = vmatpush1.msra.mxu0 0.0
    %976 = vmatprep.subr.mxu0 0.0
    %977 = vmatpush1.msra.mxu0 0.0
    %978 = vmatprep.subr.mxu0 0.0
    %979 = vmatpush1.msra.mxu0 0.0
    %980 = vmatprep.subr.mxu0 0.0
    %981 = vmatpush1.msra.mxu0 0.0
    %982 = vmatprep.subr.mxu0 0.0
    %983 = vmatpush1.msra.mxu0 0.0
    %984 = vmatprep.subr.mxu0 0.0
    %985 = vmatpush1.msra.mxu0 0.0
    %986 = vmatprep.subr.mxu0 0.0
    %987 = vmatpush1.msra.mxu0 0.0
    %988 = vmatprep.subr.mxu0 0.0
    %989 = vmatpush1.msra.mxu0 0.0
    %990 = vmatprep.subr.mxu0 0.0
    %991 = vmatpush1.msra.mxu0 0.0
    %992 = vmatprep.subr.mxu0 0.0
    %993 = vmatpush1.msra.mxu0 0.0
    %994 = vmatprep.mubr.f32.mxu0 0.0
    %995 = vmatmul.mubr.f32.gmra.mrb[0].mxu0 %v928
    %v996 = vpop.f32.mrb[0].mxu0
    %v997 = vadd.f32 0.0, %v996
    %v998 = vpop.f32.mrb[0].mxu0
    %999 = vdwg.mxu0
    %v1001 = vsel %vm39, %v839, 0
    %1003 = vmatprep.subr.mxu0 0.0
    %1004 = vmatpush1.msra.mxu0 %v919
    %1005 = vmatprep.subr.mxu0 0.0
    %1006 = vmatpush1.msra.mxu0 %v920
    %1007 = vmatprep.subr.mxu0 0.0
    %1008 = vmatpush1.msra.mxu0 %v921
    %1009 = vmatprep.subr.mxu0 0.0
    %1010 = vmatpush1.msra.mxu0 %v922
    %1011 = vmatprep.subr.mxu0 0.0
    %1012 = vmatpush1.msra.mxu0 0.0
    %1013 = vmatprep.subr.mxu0 0.0
    %1014 = vmatpush1.msra.mxu0 0.0
    %1015 = vmatprep.subr.mxu0 0.0
    %1016 = vmatpush1.msra.mxu0 0.0
    %1017 = vmatprep.subr.mxu0 0.0
    %1018 = vmatpush1.msra.mxu0 0.0
    %1019 = vmatprep.subr.mxu0 0.0
    %1020 = vmatpush1.msra.mxu0 0.0
    %1021 = vmatprep.subr.mxu0 0.0
    %1022 = vmatpush1.msra.mxu0 0.0
    %1023 = vmatprep.subr.mxu0 0.0
    %1024 = vmatpush1.msra.mxu0 0.0
    %1025 = vmatprep.subr.mxu0 0.0
    %1026 = vmatpush1.msra.mxu0 0.0
    %1027 = vmatprep.subr.mxu0 0.0
    %1028 = vmatpush1.msra.mxu0 0.0
    %1029 = vmatprep.subr.mxu0 0.0
    %1030 = vmatpush1.msra.mxu0 0.0
    %1031 = vmatprep.subr.mxu0 0.0
    %1032 = vmatpush1.msra.mxu0 0.0
    %1033 = vmatprep.subr.mxu0 0.0
    %1034 = vmatpush1.msra.mxu0 0.0
    %1035 = vmatprep.subr.mxu0 0.0
    %1036 = vmatpush1.msra.mxu0 0.0
    %1037 = vmatprep.subr.mxu0 0.0
    %1038 = vmatpush1.msra.mxu0 0.0
    %1039 = vmatprep.subr.mxu0 0.0
    %1040 = vmatpush1.msra.mxu0 0.0
    %1041 = vmatprep.subr.mxu0 0.0
    %1042 = vmatpush1.msra.mxu0 0.0
    %1043 = vmatprep.subr.mxu0 0.0
    %1044 = vmatpush1.msra.mxu0 0.0
    %1045 = vmatprep.subr.mxu0 0.0
    %1046 = vmatpush1.msra.mxu0 0.0
    %1047 = vmatprep.subr.mxu0 0.0
    %1048 = vmatpush1.msra.mxu0 0.0
    %1049 = vmatprep.subr.mxu0 0.0
    %1050 = vmatpush1.msra.mxu0 0.0
    %1051 = vmatprep.subr.mxu0 0.0
    %1052 = vmatpush1.msra.mxu0 0.0
    %1053 = vmatprep.subr.mxu0 0.0
    %1054 = vmatpush1.msra.mxu0 0.0
    %1055 = vmatprep.subr.mxu0 0.0
    %1056 = vmatpush1.msra.mxu0 0.0
    %1057 = vmatprep.subr.mxu0 0.0
    %1058 = vmatpush1.msra.mxu0 0.0
    %1059 = vmatprep.subr.mxu0 0.0
    %1060 = vmatpush1.msra.mxu0 0.0
    %1061 = vmatprep.subr.mxu0 0.0
    %1062 = vmatpush1.msra.mxu0 0.0
    %1063 = vmatprep.subr.mxu0 0.0
    %1064 = vmatpush1.msra.mxu0 0.0
    %1065 = vmatprep.subr.mxu0 0.0
    %1066 = vmatpush1.msra.mxu0 0.0
    %1067 = vmatprep.mubr.f32.mxu0 0.0
    %1068 = vmatmul.mubr.f32.gmra.mrb[0].mxu0 %v1001
    %v1069 = vpop.f32.mrb[0].mxu0
    %v1070 = vadd.f32 %v997, %v1069
    %v1071 = vpop.f32.mrb[0].mxu0
    %1072 = vdwg.mxu0
    %v1073 = vld [vmem:[%s0 + $0xc0] sm:$0xff]
    %v1074 = vld [vmem:[%s0 + $0xc8] sm:$0xff]
    %v1075 = vld [vmem:[%s0 + $0xd0] sm:$0xff]
    %v1076 = vld [vmem:[%s0 + $0xd8] sm:$0xff]
    %v1077 = vrot.slane %v916, 2
    %v1078 = vsel %vm39, %v1077, 0
    %1080 = vmatprep.subr.mxu0 0.0
    %1081 = vmatpush1.msra.mxu0 %v1073
    %1082 = vmatprep.subr.mxu0 0.0
    %1083 = vmatpush1.msra.mxu0 %v1074
    %1084 = vmatprep.subr.mxu0 0.0
    %1085 = vmatpush1.msra.mxu0 %v1075
    %1086 = vmatprep.subr.mxu0 0.0
    %1087 = vmatpush1.msra.mxu0 %v1076
    %1088 = vmatprep.subr.mxu0 0.0
    %1089 = vmatpush1.msra.mxu0 0.0
    %1090 = vmatprep.subr.mxu0 0.0
    %1091 = vmatpush1.msra.mxu0 0.0
    %1092 = vmatprep.subr.mxu0 0.0
    %1093 = vmatpush1.msra.mxu0 0.0
    %1094 = vmatprep.subr.mxu0 0.0
    %1095 = vmatpush1.msra.mxu0 0.0
    %1096 = vmatprep.subr.mxu0 0.0
    %1097 = vmatpush1.msra.mxu0 0.0
    %1098 = vmatprep.subr.mxu0 0.0
    %1099 = vmatpush1.msra.mxu0 0.0
    %1100 = vmatprep.subr.mxu0 0.0
    %1101 = vmatpush1.msra.mxu0 0.0
    %1102 = vmatprep.subr.mxu0 0.0
    %1103 = vmatpush1.msra.mxu0 0.0
    %1104 = vmatprep.subr.mxu0 0.0
    %1105 = vmatpush1.msra.mxu0 0.0
    %1106 = vmatprep.subr.mxu0 0.0
    %1107 = vmatpush1.msra.mxu0 0.0
    %1108 = vmatprep.subr.mxu0 0.0
    %1109 = vmatpush1.msra.mxu0 0.0
    %1110 = vmatprep.subr.mxu0 0.0
    %1111 = vmatpush1.msra.mxu0 0.0
    %1112 = vmatprep.subr.mxu0 0.0
    %1113 = vmatpush1.msra.mxu0 0.0
    %1114 = vmatprep.subr.mxu0 0.0
    %1115 = vmatpush1.msra.mxu0 0.0
    %1116 = vmatprep.subr.mxu0 0.0
    %1117 = vmatpush1.msra.mxu0 0.0
    %1118 = vmatprep.subr.mxu0 0.0
    %1119 = vmatpush1.msra.mxu0 0.0
    %1120 = vmatprep.subr.mxu0 0.0
    %1121 = vmatpush1.msra.mxu0 0.0
    %1122 = vmatprep.subr.mxu0 0.0
    %1123 = vmatpush1.msra.mxu0 0.0
    %1124 = vmatprep.subr.mxu0 0.0
    %1125 = vmatpush1.msra.mxu0 0.0
    %1126 = vmatprep.subr.mxu0 0.0
    %1127 = vmatpush1.msra.mxu0 0.0
    %1128 = vmatprep.subr.mxu0 0.0
    %1129 = vmatpush1.msra.mxu0 0.0
    %1130 = vmatprep.subr.mxu0 0.0
    %1131 = vmatpush1.msra.mxu0 0.0
    %1132 = vmatprep.subr.mxu0 0.0
    %1133 = vmatpush1.msra.mxu0 0.0
    %1134 = vmatprep.subr.mxu0 0.0
    %1135 = vmatpush1.msra.mxu0 0.0
    %1136 = vmatprep.subr.mxu0 0.0
    %1137 = vmatpush1.msra.mxu0 0.0
    %1138 = vmatprep.subr.mxu0 0.0
    %1139 = vmatpush1.msra.mxu0 0.0
    %1140 = vmatprep.subr.mxu0 0.0
    %1141 = vmatpush1.msra.mxu0 0.0
    %1142 = vmatprep.subr.mxu0 0.0
    %1143 = vmatpush1.msra.mxu0 0.0
    %1144 = vmatprep.mubr.f32.mxu0 0.0
    %1145 = vmatmul.mubr.f32.gmra.mrb[0].mxu0 %v1078
    %v1146 = vpop.f32.mrb[0].mxu0
    %v1147 = vadd.f32 0.0, %v1146
    %v1148 = vpop.f32.mrb[0].mxu0
    %1149 = vdwg.mxu0
    %v1150 = vadd.f32 %v1070, %v1147
    %v1151 = vlaneseq
    %v1152 = vshrl.u32 %v1151, 7
    %v1153 = vsub.s32 2, %v1152
    %v1154 = vrot.slane %v31, %v1153
    %v1155 = vadd.f32 %v1150, %v1154
    %vm1156 = vcmask 254976
    %v1157 = vsel %vm1156, %v1155, 0.0
    %v1158 = vrot.slane %v1157, 4
    %v1159 = vadd.f32 %v1157, %v1158
    %v1160 = vrot.slane %v1159, 2
    %v1161 = vadd.f32 %v1159, %v1160
    %v1162 = vrot.slane %v1161, 1
    %v1163 = vadd.f32 %v1161, %v1162
    %v1164 = vrcp.pop 2.0
    %v1165 = vmul.f32 %v1163, %v1164
    %v1166 = vsub.f32 %v1155, %v1165
    %v1167 = vmul.f32 %v1166, %v1166
    %v1168 = vsel %vm1156, %v1167, 0.0
    %v1169 = vrot.slane %v1168, 4
    %v1170 = vadd.f32 %v1168, %v1169
    %v1171 = vrot.slane %v1170, 2
    %v1172 = vadd.f32 %v1170, %v1171
    %v1173 = vrot.slane %v1172, 1
    %v1174 = vadd.f32 %v1172, %v1173
    %v1175 = vmul.f32 %v1174, %v1164
    %v1176 = vadd.f32 %v1175, 1e-05
    %v1177 = vrsqrt.pop %v1176
    %v1178 = vmul.f32 %v1166, %v1177
    %v1179 = vlaneseq
    %v1180 = vshrl.u32 %v1179, 7
    %v1181 = vsub.s32 3, %v1180
    %v1182 = vrot.slane %v31, %v1181
    %v1183 = vmul.f32 %v1178, %v1182
    %v1184 = vlaneseq
    %v1185 = vshrl.u32 %v1184, 7
    %v1186 = vsub.s32 4, %v1185
    %v1187 = vrot.slane %v31, %v1186
    %v1188 = vadd.f32 %v1183, %v1187
    %vm1189 = vcmp.ge.f32.partialorder %v1188, 0.0
    %v1190 = vmul.f32 %v1188, 0.01
    %v1191 = vsel %vm1189, %v1188, %v1190
    %v1192 = vld [vmem:[%s0 + $0xe0] sm:$0xff]
    %v1193 = vld [vmem:[%s0 + $0xe8] sm:$0xff]
    %v1194 = vld [vmem:[%s0 + $0xf0] sm:$0xff]
    %v1195 = vld [vmem:[%s0 + $0xf8] sm:$0xff]
    %v1196 = vlaneseq
    %v1197 = vshrl.u32 %v1196, 7
    %v1198 = vsub.s32 5, %v1197
    %v1199 = vrot.slane %v31, %v1198
    %v1201 = vsel %vm39, %v1191, 0
    %1203 = vmatprep.subr.mxu0 0.0
    %1204 = vmatpush1.msra.mxu0 %v1192
    %1205 = vmatprep.subr.mxu0 0.0
    %1206 = vmatpush1.msra.mxu0 %v1193
    %1207 = vmatprep.subr.mxu0 0.0
    %1208 = vmatpush1.msra.mxu0 %v1194
    %1209 = vmatprep.subr.mxu0 0.0
    %1210 = vmatpush1.msra.mxu0 %v1195
    %1211 = vmatprep.subr.mxu0 0.0
    %1212 = vmatpush1.msra.mxu0 0.0
    %1213 = vmatprep.subr.mxu0 0.0
    %1214 = vmatpush1.msra.mxu0 0.0
    %1215 = vmatprep.subr.mxu0 0.0
    %1216 = vmatpush1.msra.mxu0 0.0
    %1217 = vmatprep.subr.mxu0 0.0
    %1218 = vmatpush1.msra.mxu0 0.0
    %1219 = vmatprep.subr.mxu0 0.0
    %1220 = vmatpush1.msra.mxu0 0.0
    %1221 = vmatprep.subr.mxu0 0.0
    %1222 = vmatpush1.msra.mxu0 0.0
    %1223 = vmatprep.subr.mxu0 0.0
    %1224 = vmatpush1.msra.mxu0 0.0
    %1225 = vmatprep.subr.mxu0 0.0
    %1226 = vmatpush1.msra.mxu0 0.0
    %1227 = vmatprep.subr.mxu0 0.0
    %1228 = vmatpush1.msra.mxu0 0.0
    %1229 = vmatprep.subr.mxu0 0.0
    %1230 = vmatpush1.msra.mxu0 0.0
    %1231 = vmatprep.subr.mxu0 0.0
    %1232 = vmatpush1.msra.mxu0 0.0
    %1233 = vmatprep.subr.mxu0 0.0
    %1234 = vmatpush1.msra.mxu0 0.0
    %1235 = vmatprep.subr.mxu0 0.0
    %1236 = vmatpush1.msra.mxu0 0.0
    %1237 = vmatprep.subr.mxu0 0.0
    %1238 = vmatpush1.msra.mxu0 0.0
    %1239 = vmatprep.subr.mxu0 0.0
    %1240 = vmatpush1.msra.mxu0 0.0
    %1241 = vmatprep.subr.mxu0 0.0
    %1242 = vmatpush1.msra.mxu0 0.0
    %1243 = vmatprep.subr.mxu0 0.0
    %1244 = vmatpush1.msra.mxu0 0.0
    %1245 = vmatprep.subr.mxu0 0.0
    %1246 = vmatpush1.msra.mxu0 0.0
    %1247 = vmatprep.subr.mxu0 0.0
    %1248 = vmatpush1.msra.mxu0 0.0
    %1249 = vmatprep.subr.mxu0 0.0
    %1250 = vmatpush1.msra.mxu0 0.0
    %1251 = vmatprep.subr.mxu0 0.0
    %1252 = vmatpush1.msra.mxu0 0.0
    %1253 = vmatprep.subr.mxu0 0.0
    %1254 = vmatpush1.msra.mxu0 0.0
    %1255 = vmatprep.subr.mxu0 0.0
    %1256 = vmatpush1.msra.mxu0 0.0
    %1257 = vmatprep.subr.mxu0 0.0
    %1258 = vmatpush1.msra.mxu0 0.0
    %1259 = vmatprep.subr.mxu0 0.0
    %1260 = vmatpush1.msra.mxu0 0.0
    %1261 = vmatprep.subr.mxu0 0.0
    %1262 = vmatpush1.msra.mxu0 0.0
    %1263 = vmatprep.subr.mxu0 0.0
    %1264 = vmatpush1.msra.mxu0 0.0
    %1265 = vmatprep.subr.mxu0 0.0
    %1266 = vmatpush1.msra.mxu0 0.0
    %1267 = vmatprep.mubr.f32.mxu0 0.0
    %1268 = vmatmul.mubr.f32.gmra.mrb[0].mxu0 %v1201
    %v1269 = vpop.f32.mrb[0].mxu0
    %v1270 = vadd.f32 %v1199, %v1269
    %v1271 = vpop.f32.mrb[0].mxu0
    %1272 = vdwg.mxu0
    %vm1273 = vcmask 33792
    %1274 = vst.msk [vmem:[#allocation2] sm:$0x3] %vm1273, %v1270
    %v1275 = vld [vmem:[%s3] sm:$0x3]
    %v1276 = vmax.f32 %v1270, 0.0
    %v1277 = vmul.f32 %v1270, %v1275
    %v1278 = vsub.f32 %v1276, %v1277
    %v1279 = vand.u32 2147483647, %v1270
    %v1280 = vsub.f32 0.0, %v1279
    %v1281 = vmul.f32 %v1280, 1.442695
    %v1282 = vpow.pop %v1281
    %v1283 = vadd.f32 %v1282, 1.0
    %v1284 = vlog2.pop %v1283
    %v1285 = vmul.f32 %v1284, 0.6931472
    %v1286 = vmul.f32 -0.5, %v1282
    %v1287 = vadd.f32 %v1286, 1.0
    %v1288 = vmul.f32 %v1287, %v1282
    %v1289 = vand.u32 2147483647, %v1282
    %vm1290 = vcmp.lt.f32.partialorder %v1289, 0.0004427343
    %v1291 = vsel %vm1290, %v1288, %v1285
    %v1292 = vadd.f32 %v1278, %v1291
    %v1293 = vsel %vm1273, %v1292, 0.0
    %1294 = vadd.xlane.f32.xlu0 %v1293
    %v1295 = vpop.xlane.xlu0 %1294
    %v1296 = vrot.slane %v1295, 4
    %v1297 = vadd.f32 %v1295, %v1296
    %v1298 = vrot.slane %v1297, 2
    %v1299 = vadd.f32 %v1297, %v1298
    %v1300 = vrot.slane %v1299, 1
    %v1301 = vadd.f32 %v1299, %v1300
    %s1302 = vtos %v1301
    %v1303 = vrcp.pop 10.0
    %s1304 = vtos %v1303
    %s1305 = smul.f32 %s1302, %s1304
    %v1306 = vstv %s1305
    %vm1307 = vcmask 0
    %1308 = vst.msk [vmem:[#allocation4] sm:$0x1] %vm1307, %v1306
    // Predicated region
    $region18: #{relation_extractor_forward.1} parent=1 // pred_check
      _
    $region19: #{relation_extractor_forward.1} parent=1 // pred_check_branch
      %1310 = sbr.rel (0) target = $region21
    $region20: #{relation_extractor_forward.1} parent=1 // pred_region
      %s1312 = ssub.s32 32, 32
      %1313 = vsyncadd [#allocation3], %s1312
      %s1315 = sshll.u32 [#allocation2], 4
      %s1316 = int_to_ptr.vmem [resolvable:$true] %s1315
      %1318 = dma.vmem_to_hbm [thread:$0]  %s1316, 32, %s4, [#allocation3]
    $region21: #{relation_extractor_forward.1} parent=1 // pred_fallthru
      _
    // Predicated region
    $region22: #{relation_extractor_forward.1} parent=1 // pred_check
      _
    $region23: #{relation_extractor_forward.1} parent=1 // pred_check_branch
      %1320 = sbr.rel (0) target = $region25
    $region24: #{relation_extractor_forward.1} parent=1 // pred_region
      %s1322 = ssub.s32 16, 16
      %1323 = vsyncadd [#allocation5], %s1322
      %s1325 = sshll.u32 [#allocation4], 4
      %s1326 = int_to_ptr.vmem [resolvable:$true] %s1325
      %1328 = dma.vmem_to_hbm [thread:$0]  %s1326, 16, %s5, [#allocation5]
    $region25: #{relation_extractor_forward.1} parent=1 // pred_fallthru
      _
    // Predicated region
    $region26: #{relation_extractor_forward.1} parent=1 // pred_check
      _
    $region27: #{relation_extractor_forward.1} parent=1 // pred_check_branch
      %1330 = sbr.rel (0) target = $region29
    $region28: #{relation_extractor_forward.1} parent=1 // pred_region
      %1331 = dma.done [#allocation3], 32
    $region29: #{relation_extractor_forward.1} parent=1 // pred_fallthru
      _
    // Predicated region
    $region30: #{relation_extractor_forward.1} parent=1 // pred_check
      _
    $region31: #{relation_extractor_forward.1} parent=1 // pred_check_branch
      %1333 = sbr.rel (0) target = $region33
    $region32: #{relation_extractor_forward.1} parent=1 // pred_region
      %1334 = dma.done [#allocation5], 16
    $region33: #{relation_extractor_forward.1} parent=1 // pred_fallthru
      _
    %1335 = vsyncpa [#allocation3], 1
    %1336 = vsyncpa [#allocation5], 1

</llo_original>
